<compile_context>
chip_gen: v7x
topology: tpu7x:2x2x1
jax: 0.10.0
libtpu: 0.0.40
codegen_flags: <defaults>
</compile_context>

<pallas_src>
import numpy as np
import jax
import jax.numpy as jnp
from jax import lax
from jax.experimental import pallas as pl
from jax.experimental.pallas import tpu as pltpu

# ---------------- constants (torchmetrics SSIM defaults / module init) -------
_KS = 11            # SSIM gaussian kernel size
_SIGMA = 1.5        # SSIM gaussian sigma
_PAD = (_KS - 1) // 2
_d = np.arange(_KS, dtype=np.float64) - (_KS - 1) / 2.0
_g = np.exp(-0.5 * (_d / _SIGMA) ** 2)
_GAUSS_1D = _g / _g.sum()

_C1 = 0.01 ** 2     # (k1 * data_range)^2, data_range = 1.0
_C2 = 0.03 ** 2     # (k2 * data_range)^2
_YUV_SCALES = (1.0, 100.0, 100.0)   # register_buffer yuv_scales

# deterministic "parameter" init (logvar_init=0.0)
LOGVAR = 0.0
RECON_WEIGHT = 1.0
PERCEPTUAL_WEIGHT = 1.0
RAMP = 100000
MAX_WEIGHT_RATIO = 2.0
STEP0 = 1.0e9       # ramp never activated (buffer default)


def _folded_blur_matrix(n):
    """(n, n) matrix M with (M @ a) == valid 11-tap Gaussian conv of the
    reflect-padded vector a. Folding the reflect padding into the matrix lets
    the kernel work on the UNPADDED images."""
    band = np.zeros((n, n + _KS - 1), dtype=np.float64)
    for i in range(n):
        band[i, i:i + _KS] = _GAUSS_1D
    fold = np.zeros((n, n), dtype=np.float64)
    for k in range(n + _KS - 1):
        t = k - _PAD
        if t < 0:
            m = -t                    # left reflect
        elif t >= n:
            m = 2 * (n - 1) - t       # right reflect
        else:
            m = t
        fold[:, m] += band[:, k]
    return fold.astype(np.float32)


def _recon_partials_kernel(x_ref, xr_ref, gh_ref, gw_ref, out_ref):
    # x_ref / xr_ref: (Bt, 3, H, W) unpadded image / reconstruction (f32).
    # gh_ref: (H, H) bf16 reflect-folded row blur;  gw_ref: (W, W) bf16 col blur.
    # out_ref: (1, 8, 128) partial sums for this step, lanes 0..4 used:
    #   [sum dy^2, sum du^2, sum dv^2, sum |d| (all ch), sum ssim interior].
    Bt, C, H, W = x_ref.shape
    x = x_ref[...]
    xr = xr_ref[...]
    gh = gh_ref[...]
    gw = gw_ref[...]

    # ---- YUV-weighted MSE partials + global L1 partial (f32 VPU path) ------
    # rgb->yuv is linear, so the YUV diff equals the YUV transform of the RGB diff.
    d = x - xr                                     # (Bt, 3, H, W)
    dr, dg, db = d[:, 0], d[:, 1], d[:, 2]
    dy = 0.299 * dr + 0.587 * dg + 0.114 * db
    du = -0.147 * dr - 0.289 * dg + 0.436 * db
    dv = 0.615 * dr - 0.515 * dg - 0.100 * db
    s_y = jnp.sum(dy * dy)
    s_u = jnp.sum(du * du)
    s_v = jnp.sum(dv * dv)
    s_l1 = jnp.sum(jnp.abs(d))

    # ---- SSIM: all 5 * C * Bt blur inputs batched into two big bf16 matmuls -
    maps = []
    for b in range(Bt):
        for c in range(C):
            xc = x[b, c]
            yc = xr[b, c]
            maps += [xc, yc, xc * xc, yc * yc, xc * yc]
    n_maps = len(maps)                              # 15 * Bt

    # GH (row-direction) pass: lane-stacked (H, N*W) -> one MXU matmul.
    cat_l = jnp.concatenate(maps, axis=1).astype(jnp.bfloat16)          # (H, N*W)
    hp = jnp.dot(gh, cat_l, preferred_element_type=jnp.float32)         # (H, N*W) f32
    # GW (col-direction) pass: row-stacked (N*H, W) -> one MXU matmul.
    cat_r = jnp.concatenate(
        [hp[:, i * W:(i + 1) * W] for i in range(n_maps)], axis=0
    ).astype(jnp.bfloat16)                                              # (N*H, W)
    wp = jnp.dot(cat_r, gw, preferred_element_type=jnp.float32)         # (N*H, W) f32

    # interior mask on the (H, W) SSIM map (torchmetrics border crop)
    rowi = lax.broadcasted_iota(jnp.int32, (H, W), 0)
    coli = lax.broadcasted_iota(jnp.int32, (H, W), 1)
    inner = ((rowi >= _PAD) & (rowi < H - _PAD) &
             (coli >= _PAD) & (coli < W - _PAD)).astype(jnp.float32)

    s_ssim = jnp.float32(0.0)
    for g in range(n_maps // 5):       # one group per (image, channel)
        base = 5 * g * H
        mu_x = wp[base:base + H]
        mu_y = wp[base + H:base + 2 * H]
        e_xx = wp[base + 2 * H:base + 3 * H]
        e_yy = wp[base + 3 * H:base + 4 * H]
        e_xy = wp[base + 4 * H:base + 5 * H]
        sig_x = e_xx - mu_x * mu_x
        sig_y = e_yy - mu_y * mu_y
        sig_xy = e_xy - mu_x * mu_y
        num = (2.0 * mu_x * mu_y + _C1) * (2.0 * sig_xy + _C2)
        den = (mu_x * mu_x + mu_y * mu_y + _C1) * (sig_x + sig_y + _C2)
        # divide on the (otherwise idle) EUP slot; C2 keeps den well-conditioned.
        s_ssim = s_ssim + jnp.sum(num * pl.reciprocal(den, approx=True) * inner)

    # ---- pack the 5 scalars into one lane-dense output row ------------------
    lane = lax.broadcasted_iota(jnp.int32, (1, 8, 128), 2)
    packed = jnp.where(lane == 0, s_y, 0.0)
    packed = packed + jnp.where(lane == 1, s_u, 0.0)
    packed = packed + jnp.where(lane == 2, s_v, 0.0)
    packed = packed + jnp.where(lane == 3, s_l1, 0.0)
    packed = packed + jnp.where(lane == 4, s_ssim, 0.0)
    out_ref[...] = packed.astype(jnp.float32)


def _vmem_limit_bytes():
    try:
        cap = int(pltpu.get_tpu_info().vmem_capacity_bytes)
    except Exception:
        cap = 64 << 20          # conservative fallback (v7x-sized)
    # half of physical VMEM: ~32 MiB on v7x, ~64 MiB on v5e/v6e
    return max(16 << 20, cap // 2)


def _pick_images_per_step(B, H, W, vmem_limit):
    # rough per-image VMEM working set: input double-buffers (2 arrays * 2 bufs
    # * 3 ch * f32) + 15 blurred maps in bf16+f32 at two stages + diff temps.
    per_img = H * W * 4 * (2 * 2 * 3 + 15 * 3 + 12)
    budget = int(vmem_limit * 0.45)
    bt = 1
    for cand in range(1, min(B, 16) + 1):           # cap unroll size
        if B % cand == 0 and cand * per_img <= budget:
            bt = cand
    return bt


def image_reconstruction_loss(x, x_recon, global_step):
    x = jnp.asarray(x, jnp.float32)
    x_recon = jnp.asarray(x_recon, jnp.float32)
    B, C, H, W = x.shape
    assert C == 3, "ImageReconstructionLoss(yuv) expects RGB inputs"
    assert H > 2 * _PAD and W > 2 * _PAD, "SSIM needs H, W > 10"

    # reflect-folded separable blur matrices (bf16: only used as MXU operands)
    gh = jnp.asarray(_folded_blur_matrix(H), dtype=jnp.bfloat16)       # (H, H)
    gw = jnp.asarray(_folded_blur_matrix(W).T, dtype=jnp.bfloat16)     # (W, W)

    vmem_limit = _vmem_limit_bytes()
    bt = _pick_images_per_step(B, H, W, vmem_limit)
    n_steps = B // bt

    # TODO(synk): for very large images (>~512^2 on v7x's 64 MiB VMEM) add an H
    # row-block grid axis with a +-5-row halo (banded GH only needs +-PAD rows)
    # and accumulate the 5 partials across row steps with pl.when init/finalize.
    # TODO(synk): gh/gw are constant across the grid but still double-buffered;
    # pipeline_mode=pl.Buffered(1) (or in-kernel generation) would reclaim that
    # VMEM on v7x.
    partials = pl.pallas_call(
        _recon_partials_kernel,
        out_shape=jax.ShapeDtypeStruct((n_steps, 8, 128), jnp.float32),
        grid=(n_steps,),
        in_specs=[
            pl.BlockSpec((bt, C, H, W), lambda i: (i, 0, 0, 0)),
            pl.BlockSpec((bt, C, H, W), lambda i: (i, 0, 0, 0)),
            pl.BlockSpec((H, H), lambda i: (0, 0)),
            pl.BlockSpec((W, W), lambda i: (0, 0)),
        ],
        out_specs=pl.BlockSpec((1, 8, 128), lambda i: (i, 0, 0)),
        compiler_params=pltpu.CompilerParams(
            dimension_semantics=("parallel",),
            vmem_limit_bytes=vmem_limit),
    )(x, x_recon, gh, gw)

    sums = jnp.sum(partials[:, 0, :], axis=0)        # (128,) cross-step reduce
    n_px = B * H * W
    yuv_term = (_YUV_SCALES[0] * sums[0]
                + _YUV_SCALES[1] * sums[1]
                + _YUV_SCALES[2] * sums[2]) / n_px
    l1 = sums[3] / (n_px * C)
    n_ssim = B * C * (H - 2 * _PAD) * (W - 2 * _PAD)
    ssim_val = sums[4] / n_ssim

    ssim_loss = 1.0 - ssim_val
    recon_loss = (yuv_term + l1 + ssim_loss) * RECON_WEIGHT

    # TODO(synk): LPIPS perceptual loss needs pretrained VGG weights (no
    # checkpoint loading allowed), so the perceptual term contributes 0 here.
    perceptual = jnp.float32(0.0)

    image_loss = recon_loss + perceptual * PERCEPTUAL_WEIGHT
    image_loss_scaled = image_loss / jnp.exp(jnp.float32(LOGVAR)) + LOGVAR

    # global_step is a concrete Python number (matches the PyTorch .item() path);
    # this branch is host-side, not traced.
    max_weight = MAX_WEIGHT_RATIO - 1.0
    if global_step >= STEP0:
        weight = 1.0 + min(max_weight, max_weight * (global_step - STEP0) / RAMP)
    else:
        weight = 1.0
    final_loss = image_loss_scaled * weight / (weight + 1.0)

    stats = {
        "recon_loss": recon_loss,       # kept as jnp scalars (jit-friendly)
        "perceptual_loss": perceptual,
        "final_loss": final_loss,
        "logvar": LOGVAR,
        "image_weight": weight,
    }
    return final_loss, stats


if __name__ == "__main__":
    key = jax.random.PRNGKey(0)
    k1, k2 = jax.random.split(key)
    B, C, H, W = 2, 3, 16, 16          # RGB images -> channel dim must be 3
    x = jax.random.uniform(k1, (B, C, H, W), dtype=jnp.float32)
    noise = 0.05 * jax.random.normal(k2, (B, C, H, W), dtype=jnp.float32)
    x_recon = jnp.clip(x + noise, 0.0, 1.0)

    final_loss, stats = image_reconstruction_loss(x, x_recon, global_step=0)
    final_loss = jax.block_until_ready(final_loss)
    assert np.isfinite(float(final_loss))
    print("KERNEL_OK")
</pallas_src>

<mosaic_0001>
module attributes {stable_mosaic.version = 11 : i64} {
  func.func @_recon_partials_kernel(%arg0: i32, %arg1: memref<2x3x16x16xf32, #tpu.memory_space<vmem>>, %arg2: memref<2x3x16x16xf32, #tpu.memory_space<vmem>>, %arg3: memref<16x16xbf16, #tpu.memory_space<vmem>>, %arg4: memref<16x16xbf16, #tpu.memory_space<vmem>>, %arg5: memref<1x8x128xf32, #tpu.memory_space<vmem>>) attributes {dimension_semantics = [#tpu.dimension_semantics<parallel>], iteration_bounds = array<i64: 1>, scalar_prefetch = 0 : i64, scratch_operands = 0 : i64, tpu.core_type = #tpu.core_type<tc>, window_params = [{transform_indices = @transform_0, window_bounds = array<i64: 2, 3, 16, 16>}, {transform_indices = @transform_1, window_bounds = array<i64: 2, 3, 16, 16>}, {pipeline_mode = #tpu.pipeline_mode<synchronous>, transform_indices = @transform_2, window_bounds = array<i64: 16, 16>}, {pipeline_mode = #tpu.pipeline_mode<synchronous>, transform_indices = @transform_3, window_bounds = array<i64: 16, 16>}, {transform_indices = @transform_4, window_bounds = array<i64: 1, 8, 128>}]} {
    %c0 = arith.constant 0 : index
    %c0_0 = arith.constant 0 : index
    %c0_1 = arith.constant 0 : index
    %c0_2 = arith.constant 0 : index
    %0 = vector.load %arg1[%c0, %c0_0, %c0_1, %c0_2] : memref<2x3x16x16xf32, #tpu.memory_space<vmem>>, vector<2x3x16x16xf32>
    %c0_3 = arith.constant 0 : index
    %c0_4 = arith.constant 0 : index
    %c0_5 = arith.constant 0 : index
    %c0_6 = arith.constant 0 : index
    %1 = vector.load %arg2[%c0_3, %c0_4, %c0_5, %c0_6] : memref<2x3x16x16xf32, #tpu.memory_space<vmem>>, vector<2x3x16x16xf32>
    %c0_7 = arith.constant 0 : index
    %c0_8 = arith.constant 0 : index
    %2 = vector.load %arg3[%c0_7, %c0_8] : memref<16x16xbf16, #tpu.memory_space<vmem>>, vector<16x16xbf16>
    %c0_9 = arith.constant 0 : index
    %c0_10 = arith.constant 0 : index
    %3 = vector.load %arg4[%c0_9, %c0_10] : memref<16x16xbf16, #tpu.memory_space<vmem>>, vector<16x16xbf16>
    %4 = arith.subf %0, %1 : vector<2x3x16x16xf32>
    %5 = vector.extract_strided_slice %4 {offsets = [0, 0, 0, 0], sizes = [2, 1, 16, 16], strides = [1, 1, 1, 1]} : vector<2x3x16x16xf32> to vector<2x1x16x16xf32>
    %6 = vector.shape_cast %5 : vector<2x1x16x16xf32> to vector<2x16x16xf32>
    %7 = vector.extract_strided_slice %4 {offsets = [0, 1, 0, 0], sizes = [2, 1, 16, 16], strides = [1, 1, 1, 1]} : vector<2x3x16x16xf32> to vector<2x1x16x16xf32>
    %8 = vector.shape_cast %7 : vector<2x1x16x16xf32> to vector<2x16x16xf32>
    %9 = vector.extract_strided_slice %4 {offsets = [0, 2, 0, 0], sizes = [2, 1, 16, 16], strides = [1, 1, 1, 1]} : vector<2x3x16x16xf32> to vector<2x1x16x16xf32>
    %10 = vector.shape_cast %9 : vector<2x1x16x16xf32> to vector<2x16x16xf32>
    %cst = arith.constant 2.990000e-01 : f32
    %11 = vector.broadcast %cst : f32 to vector<2x16x16xf32>
    %12 = arith.mulf %11, %6 : vector<2x16x16xf32>
    %cst_11 = arith.constant 5.870000e-01 : f32
    %13 = vector.broadcast %cst_11 : f32 to vector<2x16x16xf32>
    %14 = arith.mulf %13, %8 : vector<2x16x16xf32>
    %15 = arith.addf %12, %14 : vector<2x16x16xf32>
    %cst_12 = arith.constant 1.140000e-01 : f32
    %16 = vector.broadcast %cst_12 : f32 to vector<2x16x16xf32>
    %17 = arith.mulf %16, %10 : vector<2x16x16xf32>
    %18 = arith.addf %15, %17 : vector<2x16x16xf32>
    %cst_13 = arith.constant -1.470000e-01 : f32
    %19 = vector.broadcast %cst_13 : f32 to vector<2x16x16xf32>
    %20 = arith.mulf %19, %6 : vector<2x16x16xf32>
    %cst_14 = arith.constant 2.890000e-01 : f32
    %21 = vector.broadcast %cst_14 : f32 to vector<2x16x16xf32>
    %22 = arith.mulf %21, %8 : vector<2x16x16xf32>
    %23 = arith.subf %20, %22 : vector<2x16x16xf32>
    %cst_15 = arith.constant 4.360000e-01 : f32
    %24 = vector.broadcast %cst_15 : f32 to vector<2x16x16xf32>
    %25 = arith.mulf %24, %10 : vector<2x16x16xf32>
    %26 = arith.addf %23, %25 : vector<2x16x16xf32>
    %cst_16 = arith.constant 6.150000e-01 : f32
    %27 = vector.broadcast %cst_16 : f32 to vector<2x16x16xf32>
    %28 = arith.mulf %27, %6 : vector<2x16x16xf32>
    %cst_17 = arith.constant 5.150000e-01 : f32
    %29 = vector.broadcast %cst_17 : f32 to vector<2x16x16xf32>
    %30 = arith.mulf %29, %8 : vector<2x16x16xf32>
    %31 = arith.subf %28, %30 : vector<2x16x16xf32>
    %cst_18 = arith.constant 1.000000e-01 : f32
    %32 = vector.broadcast %cst_18 : f32 to vector<2x16x16xf32>
    %33 = arith.mulf %32, %10 : vector<2x16x16xf32>
    %34 = arith.subf %31, %33 : vector<2x16x16xf32>
    %35 = arith.mulf %18, %18 : vector<2x16x16xf32>
    %36 = vector.shape_cast %35 : vector<2x16x16xf32> to vector<1x2x16x16xf32>
    %cst_19 = arith.constant dense<0.000000e+00> : vector<1xf32>
    %37 = vector.multi_reduction <add>, %36, %cst_19 [1, 2, 3] : vector<1x2x16x16xf32> to vector<1xf32>
    %38 = vector.shape_cast %37 : vector<1xf32> to vector<1x1x1x1xf32>
    %39 = vector.extract %38[0, 0, 0, 0] : f32 from vector<1x1x1x1xf32>
    %40 = arith.mulf %26, %26 : vector<2x16x16xf32>
    %41 = vector.shape_cast %40 : vector<2x16x16xf32> to vector<1x2x16x16xf32>
    %cst_20 = arith.constant dense<0.000000e+00> : vector<1xf32>
    %42 = vector.multi_reduction <add>, %41, %cst_20 [1, 2, 3] : vector<1x2x16x16xf32> to vector<1xf32>
    %43 = vector.shape_cast %42 : vector<1xf32> to vector<1x1x1x1xf32>
    %44 = vector.extract %43[0, 0, 0, 0] : f32 from vector<1x1x1x1xf32>
    %45 = arith.mulf %34, %34 : vector<2x16x16xf32>
    %46 = vector.shape_cast %45 : vector<2x16x16xf32> to vector<1x2x16x16xf32>
    %cst_21 = arith.constant dense<0.000000e+00> : vector<1xf32>
    %47 = vector.multi_reduction <add>, %46, %cst_21 [1, 2, 3] : vector<1x2x16x16xf32> to vector<1xf32>
    %48 = vector.shape_cast %47 : vector<1xf32> to vector<1x1x1x1xf32>
    %49 = vector.extract %48[0, 0, 0, 0] : f32 from vector<1x1x1x1xf32>
    %50 = math.absf %4 : vector<2x3x16x16xf32>
    %51 = vector.shape_cast %50 : vector<2x3x16x16xf32> to vector<1x2x3x16x16xf32>
    %cst_22 = arith.constant dense<0.000000e+00> : vector<1xf32>
    %52 = vector.multi_reduction <add>, %51, %cst_22 [1, 2, 3, 4] : vector<1x2x3x16x16xf32> to vector<1xf32>
    %53 = vector.shape_cast %52 : vector<1xf32> to vector<1x1x1x1x1xf32>
    %54 = vector.extract %53[0, 0, 0, 0, 0] : f32 from vector<1x1x1x1x1xf32>
    %55 = vector.extract_strided_slice %0 {offsets = [0, 0, 0, 0], sizes = [1, 1, 16, 16], strides = [1, 1, 1, 1]} : vector<2x3x16x16xf32> to vector<1x1x16x16xf32>
    %56 = vector.shape_cast %55 : vector<1x1x16x16xf32> to vector<16x16xf32>
    %57 = vector.extract_strided_slice %1 {offsets = [0, 0, 0, 0], sizes = [1, 1, 16, 16], strides = [1, 1, 1, 1]} : vector<2x3x16x16xf32> to vector<1x1x16x16xf32>
    %58 = vector.shape_cast %57 : vector<1x1x16x16xf32> to vector<16x16xf32>
    %59 = arith.mulf %56, %56 : vector<16x16xf32>
    %60 = arith.mulf %58, %58 : vector<16x16xf32>
    %61 = arith.mulf %56, %58 : vector<16x16xf32>
    %62 = vector.extract_strided_slice %0 {offsets = [0, 1, 0, 0], sizes = [1, 1, 16, 16], strides = [1, 1, 1, 1]} : vector<2x3x16x16xf32> to vector<1x1x16x16xf32>
    %63 = vector.shape_cast %62 : vector<1x1x16x16xf32> to vector<16x16xf32>
    %64 = vector.extract_strided_slice %1 {offsets = [0, 1, 0, 0], sizes = [1, 1, 16, 16], strides = [1, 1, 1, 1]} : vector<2x3x16x16xf32> to vector<1x1x16x16xf32>
    %65 = vector.shape_cast %64 : vector<1x1x16x16xf32> to vector<16x16xf32>
    %66 = arith.mulf %63, %63 : vector<16x16xf32>
    %67 = arith.mulf %65, %65 : vector<16x16xf32>
    %68 = arith.mulf %63, %65 : vector<16x16xf32>
    %69 = vector.extract_strided_slice %0 {offsets = [0, 2, 0, 0], sizes = [1, 1, 16, 16], strides = [1, 1, 1, 1]} : vector<2x3x16x16xf32> to vector<1x1x16x16xf32>
    %70 = vector.shape_cast %69 : vector<1x1x16x16xf32> to vector<16x16xf32>
    %71 = vector.extract_strided_slice %1 {offsets = [0, 2, 0, 0], sizes = [1, 1, 16, 16], strides = [1, 1, 1, 1]} : vector<2x3x16x16xf32> to vector<1x1x16x16xf32>
    %72 = vector.shape_cast %71 : vector<1x1x16x16xf32> to vector<16x16xf32>
    %73 = arith.mulf %70, %70 : vector<16x16xf32>
    %74 = arith.mulf %72, %72 : vector<16x16xf32>
    %75 = arith.mulf %70, %72 : vector<16x16xf32>
    %76 = vector.extract_strided_slice %0 {offsets = [1, 0, 0, 0], sizes = [1, 1, 16, 16], strides = [1, 1, 1, 1]} : vector<2x3x16x16xf32> to vector<1x1x16x16xf32>
    %77 = vector.shape_cast %76 : vector<1x1x16x16xf32> to vector<16x16xf32>
    %78 = vector.extract_strided_slice %1 {offsets = [1, 0, 0, 0], sizes = [1, 1, 16, 16], strides = [1, 1, 1, 1]} : vector<2x3x16x16xf32> to vector<1x1x16x16xf32>
    %79 = vector.shape_cast %78 : vector<1x1x16x16xf32> to vector<16x16xf32>
    %80 = arith.mulf %77, %77 : vector<16x16xf32>
    %81 = arith.mulf %79, %79 : vector<16x16xf32>
    %82 = arith.mulf %77, %79 : vector<16x16xf32>
    %83 = vector.extract_strided_slice %0 {offsets = [1, 1, 0, 0], sizes = [1, 1, 16, 16], strides = [1, 1, 1, 1]} : vector<2x3x16x16xf32> to vector<1x1x16x16xf32>
    %84 = vector.shape_cast %83 : vector<1x1x16x16xf32> to vector<16x16xf32>
    %85 = vector.extract_strided_slice %1 {offsets = [1, 1, 0, 0], sizes = [1, 1, 16, 16], strides = [1, 1, 1, 1]} : vector<2x3x16x16xf32> to vector<1x1x16x16xf32>
    %86 = vector.shape_cast %85 : vector<1x1x16x16xf32> to vector<16x16xf32>
    %87 = arith.mulf %84, %84 : vector<16x16xf32>
    %88 = arith.mulf %86, %86 : vector<16x16xf32>
    %89 = arith.mulf %84, %86 : vector<16x16xf32>
    %90 = vector.extract_strided_slice %0 {offsets = [1, 2, 0, 0], sizes = [1, 1, 16, 16], strides = [1, 1, 1, 1]} : vector<2x3x16x16xf32> to vector<1x1x16x16xf32>
    %91 = vector.shape_cast %90 : vector<1x1x16x16xf32> to vector<16x16xf32>
    %92 = vector.extract_strided_slice %1 {offsets = [1, 2, 0, 0], sizes = [1, 1, 16, 16], strides = [1, 1, 1, 1]} : vector<2x3x16x16xf32> to vector<1x1x16x16xf32>
    %93 = vector.shape_cast %92 : vector<1x1x16x16xf32> to vector<16x16xf32>
    %94 = arith.mulf %91, %91 : vector<16x16xf32>
    %95 = arith.mulf %93, %93 : vector<16x16xf32>
    %96 = arith.mulf %91, %93 : vector<16x16xf32>
    %97 = tpu.concatenate %56, %58, %59, %60, %61, %63, %65, %66, %67, %68, %70, %72, %73, %74, %75, %77 in 1 : vector<16x16xf32>, vector<16x16xf32>, vector<16x16xf32>, vector<16x16xf32>, vector<16x16xf32>, vector<16x16xf32>, vector<16x16xf32>, vector<16x16xf32>, vector<16x16xf32>, vector<16x16xf32>, vector<16x16xf32>, vector<16x16xf32>, vector<16x16xf32>, vector<16x16xf32>, vector<16x16xf32>, vector<16x16xf32> -> vector<16x256xf32>
    %98 = tpu.concatenate %79, %80, %81, %82, %84, %86, %87, %88, %89, %91, %93, %94, %95, %96 in 1 : vector<16x16xf32>, vector<16x16xf32>, vector<16x16xf32>, vector<16x16xf32>, vector<16x16xf32>, vector<16x16xf32>, vector<16x16xf32>, vector<16x16xf32>, vector<16x16xf32>, vector<16x16xf32>, vector<16x16xf32>, vector<16x16xf32>, vector<16x16xf32>, vector<16x16xf32> -> vector<16x224xf32>
    %99 = tpu.concatenate %97, %98 in 1 : vector<16x256xf32>, vector<16x224xf32> -> vector<16x480xf32>
    %100 = arith.truncf %99 : vector<16x480xf32> to vector<16x480xbf16>
    %cst_23 = arith.constant dense<0.000000e+00> : vector<16x480xf32>
    %101 = tpu.matmul %2, %100, %cst_23 {dimension_numbers = #tpu.dot_dimension_numbers<[1], [0], [0], [1], [0, 0, 1, 1], [], []>} : vector<16x16xbf16>, vector<16x480xbf16>, vector<16x480xf32> -> vector<16x480xf32>
    %102 = vector.extract_strided_slice %101 {offsets = [0, 0], sizes = [16, 16], strides = [1, 1]} : vector<16x480xf32> to vector<16x16xf32>
    %103 = vector.extract_strided_slice %101 {offsets = [0, 16], sizes = [16, 16], strides = [1, 1]} : vector<16x480xf32> to vector<16x16xf32>
    %104 = vector.extract_strided_slice %101 {offsets = [0, 32], sizes = [16, 16], strides = [1, 1]} : vector<16x480xf32> to vector<16x16xf32>
    %105 = vector.extract_strided_slice %101 {offsets = [0, 48], sizes = [16, 16], strides = [1, 1]} : vector<16x480xf32> to vector<16x16xf32>
    %106 = vector.extract_strided_slice %101 {offsets = [0, 64], sizes = [16, 16], strides = [1, 1]} : vector<16x480xf32> to vector<16x16xf32>
    %107 = vector.extract_strided_slice %101 {offsets = [0, 80], sizes = [16, 16], strides = [1, 1]} : vector<16x480xf32> to vector<16x16xf32>
    %108 = vector.extract_strided_slice %101 {offsets = [0, 96], sizes = [16, 16], strides = [1, 1]} : vector<16x480xf32> to vector<16x16xf32>
    %109 = vector.extract_strided_slice %101 {offsets = [0, 112], sizes = [16, 16], strides = [1, 1]} : vector<16x480xf32> to vector<16x16xf32>
    %110 = vector.extract_strided_slice %101 {offsets = [0, 128], sizes = [16, 16], strides = [1, 1]} : vector<16x480xf32> to vector<16x16xf32>
    %111 = vector.extract_strided_slice %101 {offsets = [0, 144], sizes = [16, 16], strides = [1, 1]} : vector<16x480xf32> to vector<16x16xf32>
    %112 = vector.extract_strided_slice %101 {offsets = [0, 160], sizes = [16, 16], strides = [1, 1]} : vector<16x480xf32> to vector<16x16xf32>
    %113 = vector.extract_strided_slice %101 {offsets = [0, 176], sizes = [16, 16], strides = [1, 1]} : vector<16x480xf32> to vector<16x16xf32>
    %114 = vector.extract_strided_slice %101 {offsets = [0, 192], sizes = [16, 16], strides = [1, 1]} : vector<16x480xf32> to vector<16x16xf32>
    %115 = vector.extract_strided_slice %101 {offsets = [0, 208], sizes = [16, 16], strides = [1, 1]} : vector<16x480xf32> to vector<16x16xf32>
    %116 = vector.extract_strided_slice %101 {offsets = [0, 224], sizes = [16, 16], strides = [1, 1]} : vector<16x480xf32> to vector<16x16xf32>
    %117 = vector.extract_strided_slice %101 {offsets = [0, 240], sizes = [16, 16], strides = [1, 1]} : vector<16x480xf32> to vector<16x16xf32>
    %118 = vector.extract_strided_slice %101 {offsets = [0, 256], sizes = [16, 16], strides = [1, 1]} : vector<16x480xf32> to vector<16x16xf32>
    %119 = vector.extract_strided_slice %101 {offsets = [0, 272], sizes = [16, 16], strides = [1, 1]} : vector<16x480xf32> to vector<16x16xf32>
    %120 = vector.extract_strided_slice %101 {offsets = [0, 288], sizes = [16, 16], strides = [1, 1]} : vector<16x480xf32> to vector<16x16xf32>
    %121 = vector.extract_strided_slice %101 {offsets = [0, 304], sizes = [16, 16], strides = [1, 1]} : vector<16x480xf32> to vector<16x16xf32>
    %122 = vector.extract_strided_slice %101 {offsets = [0, 320], sizes = [16, 16], strides = [1, 1]} : vector<16x480xf32> to vector<16x16xf32>
    %123 = vector.extract_strided_slice %101 {offsets = [0, 336], sizes = [16, 16], strides = [1, 1]} : vector<16x480xf32> to vector<16x16xf32>
    %124 = vector.extract_strided_slice %101 {offsets = [0, 352], sizes = [16, 16], strides = [1, 1]} : vector<16x480xf32> to vector<16x16xf32>
    %125 = vector.extract_strided_slice %101 {offsets = [0, 368], sizes = [16, 16], strides = [1, 1]} : vector<16x480xf32> to vector<16x16xf32>
    %126 = vector.extract_strided_slice %101 {offsets = [0, 384], sizes = [16, 16], strides = [1, 1]} : vector<16x480xf32> to vector<16x16xf32>
    %127 = vector.extract_strided_slice %101 {offsets = [0, 400], sizes = [16, 16], strides = [1, 1]} : vector<16x480xf32> to vector<16x16xf32>
    %128 = vector.extract_strided_slice %101 {offsets = [0, 416], sizes = [16, 16], strides = [1, 1]} : vector<16x480xf32> to vector<16x16xf32>
    %129 = vector.extract_strided_slice %101 {offsets = [0, 432], sizes = [16, 16], strides = [1, 1]} : vector<16x480xf32> to vector<16x16xf32>
    %130 = vector.extract_strided_slice %101 {offsets = [0, 448], sizes = [16, 16], strides = [1, 1]} : vector<16x480xf32> to vector<16x16xf32>
    %131 = vector.extract_strided_slice %101 {offsets = [0, 464], sizes = [16, 16], strides = [1, 1]} : vector<16x480xf32> to vector<16x16xf32>
    %132 = tpu.concatenate %102, %103, %104, %105, %106, %107, %108, %109, %110, %111, %112, %113, %114, %115, %116, %117 in 0 : vector<16x16xf32>, vector<16x16xf32>, vector<16x16xf32>, vector<16x16xf32>, vector<16x16xf32>, vector<16x16xf32>, vector<16x16xf32>, vector<16x16xf32>, vector<16x16xf32>, vector<16x16xf32>, vector<16x16xf32>, vector<16x16xf32>, vector<16x16xf32>, vector<16x16xf32>, vector<16x16xf32>, vector<16x16xf32> -> vector<256x16xf32>
    %133 = tpu.concatenate %118, %119, %120, %121, %122, %123, %124, %125, %126, %127, %128, %129, %130, %131 in 0 : vector<16x16xf32>, vector<16x16xf32>, vector<16x16xf32>, vector<16x16xf32>, vector<16x16xf32>, vector<16x16xf32>, vector<16x16xf32>, vector<16x16xf32>, vector<16x16xf32>, vector<16x16xf32>, vector<16x16xf32>, vector<16x16xf32>, vector<16x16xf32>, vector<16x16xf32> -> vector<224x16xf32>
    %134 = tpu.concatenate %132, %133 in 0 : vector<256x16xf32>, vector<224x16xf32> -> vector<480x16xf32>
    %135 = arith.truncf %134 : vector<480x16xf32> to vector<480x16xbf16>
    %cst_24 = arith.constant dense<0.000000e+00> : vector<480x16xf32>
    %136 = tpu.matmul %135, %3, %cst_24 {dimension_numbers = #tpu.dot_dimension_numbers<[1], [0], [0], [1], [0, 0, 1, 1], [], []>} : vector<480x16xbf16>, vector<16x16xbf16>, vector<480x16xf32> -> vector<480x16xf32>
    %137 = tpu.iota {dimensions = array<i32: 0>} : vector<16x16xi32>
    %138 = tpu.iota {dimensions = array<i32: 1>} : vector<16x16xi32>
    %c5_i32 = arith.constant 5 : i32
    %139 = vector.broadcast %c5_i32 : i32 to vector<16x16xi32>
    %140 = arith.cmpi sge, %137, %139 : vector<16x16xi32>
    %c11_i32 = arith.constant 11 : i32
    %141 = vector.broadcast %c11_i32 : i32 to vector<16x16xi32>
    %142 = arith.cmpi slt, %137, %141 : vector<16x16xi32>
    %143 = arith.andi %140, %142 : vector<16x16xi1>
    %c5_i32_25 = arith.constant 5 : i32
    %144 = vector.broadcast %c5_i32_25 : i32 to vector<16x16xi32>
    %145 = arith.cmpi sge, %138, %144 : vector<16x16xi32>
    %146 = arith.andi %143, %145 : vector<16x16xi1>
    %c11_i32_26 = arith.constant 11 : i32
    %147 = vector.broadcast %c11_i32_26 : i32 to vector<16x16xi32>
    %148 = arith.cmpi slt, %138, %147 : vector<16x16xi32>
    %149 = arith.andi %146, %148 : vector<16x16xi1>
    %150 = arith.extui %149 : vector<16x16xi1> to vector<16x16xi32>
    %151 = arith.sitofp %150 : vector<16x16xi32> to vector<16x16xf32>
    %152 = vector.extract_strided_slice %136 {offsets = [0, 0], sizes = [16, 16], strides = [1, 1]} : vector<480x16xf32> to vector<16x16xf32>
    %153 = vector.extract_strided_slice %136 {offsets = [16, 0], sizes = [16, 16], strides = [1, 1]} : vector<480x16xf32> to vector<16x16xf32>
    %154 = vector.extract_strided_slice %136 {offsets = [32, 0], sizes = [16, 16], strides = [1, 1]} : vector<480x16xf32> to vector<16x16xf32>
    %155 = vector.extract_strided_slice %136 {offsets = [48, 0], sizes = [16, 16], strides = [1, 1]} : vector<480x16xf32> to vector<16x16xf32>
    %156 = vector.extract_strided_slice %136 {offsets = [64, 0], sizes = [16, 16], strides = [1, 1]} : vector<480x16xf32> to vector<16x16xf32>
    %157 = arith.mulf %152, %152 : vector<16x16xf32>
    %158 = arith.subf %154, %157 : vector<16x16xf32>
    %159 = arith.mulf %153, %153 : vector<16x16xf32>
    %160 = arith.subf %155, %159 : vector<16x16xf32>
    %161 = arith.mulf %152, %153 : vector<16x16xf32>
    %162 = arith.subf %156, %161 : vector<16x16xf32>
    %cst_27 = arith.constant 2.000000e+00 : f32
    %163 = vector.broadcast %cst_27 : f32 to vector<16x16xf32>
    %164 = arith.mulf %163, %152 : vector<16x16xf32>
    %165 = arith.mulf %164, %153 : vector<16x16xf32>
    %cst_28 = arith.constant 9.99999974E-5 : f32
    %166 = vector.broadcast %cst_28 : f32 to vector<16x16xf32>
    %167 = arith.addf %165, %166 : vector<16x16xf32>
    %cst_29 = arith.constant 2.000000e+00 : f32
    %168 = vector.broadcast %cst_29 : f32 to vector<16x16xf32>
    %169 = arith.mulf %168, %162 : vector<16x16xf32>
    %cst_30 = arith.constant 8.99999984E-4 : f32
    %170 = vector.broadcast %cst_30 : f32 to vector<16x16xf32>
    %171 = arith.addf %169, %170 : vector<16x16xf32>
    %172 = arith.mulf %167, %171 : vector<16x16xf32>
    %173 = arith.mulf %152, %152 : vector<16x16xf32>
    %174 = arith.mulf %153, %153 : vector<16x16xf32>
    %175 = arith.addf %173, %174 : vector<16x16xf32>
    %cst_31 = arith.constant 9.99999974E-5 : f32
    %176 = vector.broadcast %cst_31 : f32 to vector<16x16xf32>
    %177 = arith.addf %175, %176 : vector<16x16xf32>
    %178 = arith.addf %158, %160 : vector<16x16xf32>
    %cst_32 = arith.constant 8.99999984E-4 : f32
    %179 = vector.broadcast %cst_32 : f32 to vector<16x16xf32>
    %180 = arith.addf %178, %179 : vector<16x16xf32>
    %181 = arith.mulf %177, %180 : vector<16x16xf32>
    %182 = tpu.reciprocal %181 {approx = true} : vector<16x16xf32> -> vector<16x16xf32>
    %183 = arith.mulf %172, %182 : vector<16x16xf32>
    %184 = arith.mulf %183, %151 : vector<16x16xf32>
    %185 = vector.shape_cast %184 : vector<16x16xf32> to vector<1x16x16xf32>
    %cst_33 = arith.constant dense<0.000000e+00> : vector<1xf32>
    %186 = vector.multi_reduction <add>, %185, %cst_33 [1, 2] : vector<1x16x16xf32> to vector<1xf32>
    %187 = vector.shape_cast %186 : vector<1xf32> to vector<1x1x1xf32>
    %188 = vector.extract %187[0, 0, 0] : f32 from vector<1x1x1xf32>
    %cst_34 = arith.constant 0.000000e+00 : f32
    %189 = arith.addf %cst_34, %188 : f32
    %190 = vector.extract_strided_slice %136 {offsets = [80, 0], sizes = [16, 16], strides = [1, 1]} : vector<480x16xf32> to vector<16x16xf32>
    %191 = vector.extract_strided_slice %136 {offsets = [96, 0], sizes = [16, 16], strides = [1, 1]} : vector<480x16xf32> to vector<16x16xf32>
    %192 = vector.extract_strided_slice %136 {offsets = [112, 0], sizes = [16, 16], strides = [1, 1]} : vector<480x16xf32> to vector<16x16xf32>
    %193 = vector.extract_strided_slice %136 {offsets = [128, 0], sizes = [16, 16], strides = [1, 1]} : vector<480x16xf32> to vector<16x16xf32>
    %194 = vector.extract_strided_slice %136 {offsets = [144, 0], sizes = [16, 16], strides = [1, 1]} : vector<480x16xf32> to vector<16x16xf32>
    %195 = arith.mulf %190, %190 : vector<16x16xf32>
    %196 = arith.subf %192, %195 : vector<16x16xf32>
    %197 = arith.mulf %191, %191 : vector<16x16xf32>
    %198 = arith.subf %193, %197 : vector<16x16xf32>
    %199 = arith.mulf %190, %191 : vector<16x16xf32>
    %200 = arith.subf %194, %199 : vector<16x16xf32>
    %cst_35 = arith.constant 2.000000e+00 : f32
    %201 = vector.broadcast %cst_35 : f32 to vector<16x16xf32>
    %202 = arith.mulf %201, %190 : vector<16x16xf32>
    %203 = arith.mulf %202, %191 : vector<16x16xf32>
    %cst_36 = arith.constant 9.99999974E-5 : f32
    %204 = vector.broadcast %cst_36 : f32 to vector<16x16xf32>
    %205 = arith.addf %203, %204 : vector<16x16xf32>
    %cst_37 = arith.constant 2.000000e+00 : f32
    %206 = vector.broadcast %cst_37 : f32 to vector<16x16xf32>
    %207 = arith.mulf %206, %200 : vector<16x16xf32>
    %cst_38 = arith.constant 8.99999984E-4 : f32
    %208 = vector.broadcast %cst_38 : f32 to vector<16x16xf32>
    %209 = arith.addf %207, %208 : vector<16x16xf32>
    %210 = arith.mulf %205, %209 : vector<16x16xf32>
    %211 = arith.mulf %190, %190 : vector<16x16xf32>
    %212 = arith.mulf %191, %191 : vector<16x16xf32>
    %213 = arith.addf %211, %212 : vector<16x16xf32>
    %cst_39 = arith.constant 9.99999974E-5 : f32
    %214 = vector.broadcast %cst_39 : f32 to vector<16x16xf32>
    %215 = arith.addf %213, %214 : vector<16x16xf32>
    %216 = arith.addf %196, %198 : vector<16x16xf32>
    %cst_40 = arith.constant 8.99999984E-4 : f32
    %217 = vector.broadcast %cst_40 : f32 to vector<16x16xf32>
    %218 = arith.addf %216, %217 : vector<16x16xf32>
    %219 = arith.mulf %215, %218 : vector<16x16xf32>
    %220 = tpu.reciprocal %219 {approx = true} : vector<16x16xf32> -> vector<16x16xf32>
    %221 = arith.mulf %210, %220 : vector<16x16xf32>
    %222 = arith.mulf %221, %151 : vector<16x16xf32>
    %223 = vector.shape_cast %222 : vector<16x16xf32> to vector<1x16x16xf32>
    %cst_41 = arith.constant dense<0.000000e+00> : vector<1xf32>
    %224 = vector.multi_reduction <add>, %223, %cst_41 [1, 2] : vector<1x16x16xf32> to vector<1xf32>
    %225 = vector.shape_cast %224 : vector<1xf32> to vector<1x1x1xf32>
    %226 = vector.extract %225[0, 0, 0] : f32 from vector<1x1x1xf32>
    %227 = arith.addf %189, %226 : f32
    %228 = vector.extract_strided_slice %136 {offsets = [160, 0], sizes = [16, 16], strides = [1, 1]} : vector<480x16xf32> to vector<16x16xf32>
    %229 = vector.extract_strided_slice %136 {offsets = [176, 0], sizes = [16, 16], strides = [1, 1]} : vector<480x16xf32> to vector<16x16xf32>
    %230 = vector.extract_strided_slice %136 {offsets = [192, 0], sizes = [16, 16], strides = [1, 1]} : vector<480x16xf32> to vector<16x16xf32>
    %231 = vector.extract_strided_slice %136 {offsets = [208, 0], sizes = [16, 16], strides = [1, 1]} : vector<480x16xf32> to vector<16x16xf32>
    %232 = vector.extract_strided_slice %136 {offsets = [224, 0], sizes = [16, 16], strides = [1, 1]} : vector<480x16xf32> to vector<16x16xf32>
    %233 = arith.mulf %228, %228 : vector<16x16xf32>
    %234 = arith.subf %230, %233 : vector<16x16xf32>
    %235 = arith.mulf %229, %229 : vector<16x16xf32>
    %236 = arith.subf %231, %235 : vector<16x16xf32>
    %237 = arith.mulf %228, %229 : vector<16x16xf32>
    %238 = arith.subf %232, %237 : vector<16x16xf32>
    %cst_42 = arith.constant 2.000000e+00 : f32
    %239 = vector.broadcast %cst_42 : f32 to vector<16x16xf32>
    %240 = arith.mulf %239, %228 : vector<16x16xf32>
    %241 = arith.mulf %240, %229 : vector<16x16xf32>
    %cst_43 = arith.constant 9.99999974E-5 : f32
    %242 = vector.broadcast %cst_43 : f32 to vector<16x16xf32>
    %243 = arith.addf %241, %242 : vector<16x16xf32>
    %cst_44 = arith.constant 2.000000e+00 : f32
    %244 = vector.broadcast %cst_44 : f32 to vector<16x16xf32>
    %245 = arith.mulf %244, %238 : vector<16x16xf32>
    %cst_45 = arith.constant 8.99999984E-4 : f32
    %246 = vector.broadcast %cst_45 : f32 to vector<16x16xf32>
    %247 = arith.addf %245, %246 : vector<16x16xf32>
    %248 = arith.mulf %243, %247 : vector<16x16xf32>
    %249 = arith.mulf %228, %228 : vector<16x16xf32>
    %250 = arith.mulf %229, %229 : vector<16x16xf32>
    %251 = arith.addf %249, %250 : vector<16x16xf32>
    %cst_46 = arith.constant 9.99999974E-5 : f32
    %252 = vector.broadcast %cst_46 : f32 to vector<16x16xf32>
    %253 = arith.addf %251, %252 : vector<16x16xf32>
    %254 = arith.addf %234, %236 : vector<16x16xf32>
    %cst_47 = arith.constant 8.99999984E-4 : f32
    %255 = vector.broadcast %cst_47 : f32 to vector<16x16xf32>
    %256 = arith.addf %254, %255 : vector<16x16xf32>
    %257 = arith.mulf %253, %256 : vector<16x16xf32>
    %258 = tpu.reciprocal %257 {approx = true} : vector<16x16xf32> -> vector<16x16xf32>
    %259 = arith.mulf %248, %258 : vector<16x16xf32>
    %260 = arith.mulf %259, %151 : vector<16x16xf32>
    %261 = vector.shape_cast %260 : vector<16x16xf32> to vector<1x16x16xf32>
    %cst_48 = arith.constant dense<0.000000e+00> : vector<1xf32>
    %262 = vector.multi_reduction <add>, %261, %cst_48 [1, 2] : vector<1x16x16xf32> to vector<1xf32>
    %263 = vector.shape_cast %262 : vector<1xf32> to vector<1x1x1xf32>
    %264 = vector.extract %263[0, 0, 0] : f32 from vector<1x1x1xf32>
    %265 = arith.addf %227, %264 : f32
    %266 = vector.extract_strided_slice %136 {offsets = [240, 0], sizes = [16, 16], strides = [1, 1]} : vector<480x16xf32> to vector<16x16xf32>
    %267 = vector.extract_strided_slice %136 {offsets = [256, 0], sizes = [16, 16], strides = [1, 1]} : vector<480x16xf32> to vector<16x16xf32>
    %268 = vector.extract_strided_slice %136 {offsets = [272, 0], sizes = [16, 16], strides = [1, 1]} : vector<480x16xf32> to vector<16x16xf32>
    %269 = vector.extract_strided_slice %136 {offsets = [288, 0], sizes = [16, 16], strides = [1, 1]} : vector<480x16xf32> to vector<16x16xf32>
    %270 = vector.extract_strided_slice %136 {offsets = [304, 0], sizes = [16, 16], strides = [1, 1]} : vector<480x16xf32> to vector<16x16xf32>
    %271 = arith.mulf %266, %266 : vector<16x16xf32>
    %272 = arith.subf %268, %271 : vector<16x16xf32>
    %273 = arith.mulf %267, %267 : vector<16x16xf32>
    %274 = arith.subf %269, %273 : vector<16x16xf32>
    %275 = arith.mulf %266, %267 : vector<16x16xf32>
    %276 = arith.subf %270, %275 : vector<16x16xf32>
    %cst_49 = arith.constant 2.000000e+00 : f32
    %277 = vector.broadcast %cst_49 : f32 to vector<16x16xf32>
    %278 = arith.mulf %277, %266 : vector<16x16xf32>
    %279 = arith.mulf %278, %267 : vector<16x16xf32>
    %cst_50 = arith.constant 9.99999974E-5 : f32
    %280 = vector.broadcast %cst_50 : f32 to vector<16x16xf32>
    %281 = arith.addf %279, %280 : vector<16x16xf32>
    %cst_51 = arith.constant 2.000000e+00 : f32
    %282 = vector.broadcast %cst_51 : f32 to vector<16x16xf32>
    %283 = arith.mulf %282, %276 : vector<16x16xf32>
    %cst_52 = arith.constant 8.99999984E-4 : f32
    %284 = vector.broadcast %cst_52 : f32 to vector<16x16xf32>
    %285 = arith.addf %283, %284 : vector<16x16xf32>
    %286 = arith.mulf %281, %285 : vector<16x16xf32>
    %287 = arith.mulf %266, %266 : vector<16x16xf32>
    %288 = arith.mulf %267, %267 : vector<16x16xf32>
    %289 = arith.addf %287, %288 : vector<16x16xf32>
    %cst_53 = arith.constant 9.99999974E-5 : f32
    %290 = vector.broadcast %cst_53 : f32 to vector<16x16xf32>
    %291 = arith.addf %289, %290 : vector<16x16xf32>
    %292 = arith.addf %272, %274 : vector<16x16xf32>
    %cst_54 = arith.constant 8.99999984E-4 : f32
    %293 = vector.broadcast %cst_54 : f32 to vector<16x16xf32>
    %294 = arith.addf %292, %293 : vector<16x16xf32>
    %295 = arith.mulf %291, %294 : vector<16x16xf32>
    %296 = tpu.reciprocal %295 {approx = true} : vector<16x16xf32> -> vector<16x16xf32>
    %297 = arith.mulf %286, %296 : vector<16x16xf32>
    %298 = arith.mulf %297, %151 : vector<16x16xf32>
    %299 = vector.shape_cast %298 : vector<16x16xf32> to vector<1x16x16xf32>
    %cst_55 = arith.constant dense<0.000000e+00> : vector<1xf32>
    %300 = vector.multi_reduction <add>, %299, %cst_55 [1, 2] : vector<1x16x16xf32> to vector<1xf32>
    %301 = vector.shape_cast %300 : vector<1xf32> to vector<1x1x1xf32>
    %302 = vector.extract %301[0, 0, 0] : f32 from vector<1x1x1xf32>
    %303 = arith.addf %265, %302 : f32
    %304 = vector.extract_strided_slice %136 {offsets = [320, 0], sizes = [16, 16], strides = [1, 1]} : vector<480x16xf32> to vector<16x16xf32>
    %305 = vector.extract_strided_slice %136 {offsets = [336, 0], sizes = [16, 16], strides = [1, 1]} : vector<480x16xf32> to vector<16x16xf32>
    %306 = vector.extract_strided_slice %136 {offsets = [352, 0], sizes = [16, 16], strides = [1, 1]} : vector<480x16xf32> to vector<16x16xf32>
    %307 = vector.extract_strided_slice %136 {offsets = [368, 0], sizes = [16, 16], strides = [1, 1]} : vector<480x16xf32> to vector<16x16xf32>
    %308 = vector.extract_strided_slice %136 {offsets = [384, 0], sizes = [16, 16], strides = [1, 1]} : vector<480x16xf32> to vector<16x16xf32>
    %309 = arith.mulf %304, %304 : vector<16x16xf32>
    %310 = arith.subf %306, %309 : vector<16x16xf32>
    %311 = arith.mulf %305, %305 : vector<16x16xf32>
    %312 = arith.subf %307, %311 : vector<16x16xf32>
    %313 = arith.mulf %304, %305 : vector<16x16xf32>
    %314 = arith.subf %308, %313 : vector<16x16xf32>
    %cst_56 = arith.constant 2.000000e+00 : f32
    %315 = vector.broadcast %cst_56 : f32 to vector<16x16xf32>
    %316 = arith.mulf %315, %304 : vector<16x16xf32>
    %317 = arith.mulf %316, %305 : vector<16x16xf32>
    %cst_57 = arith.constant 9.99999974E-5 : f32
    %318 = vector.broadcast %cst_57 : f32 to vector<16x16xf32>
    %319 = arith.addf %317, %318 : vector<16x16xf32>
    %cst_58 = arith.constant 2.000000e+00 : f32
    %320 = vector.broadcast %cst_58 : f32 to vector<16x16xf32>
    %321 = arith.mulf %320, %314 : vector<16x16xf32>
    %cst_59 = arith.constant 8.99999984E-4 : f32
    %322 = vector.broadcast %cst_59 : f32 to vector<16x16xf32>
    %323 = arith.addf %321, %322 : vector<16x16xf32>
    %324 = arith.mulf %319, %323 : vector<16x16xf32>
    %325 = arith.mulf %304, %304 : vector<16x16xf32>
    %326 = arith.mulf %305, %305 : vector<16x16xf32>
    %327 = arith.addf %325, %326 : vector<16x16xf32>
    %cst_60 = arith.constant 9.99999974E-5 : f32
    %328 = vector.broadcast %cst_60 : f32 to vector<16x16xf32>
    %329 = arith.addf %327, %328 : vector<16x16xf32>
    %330 = arith.addf %310, %312 : vector<16x16xf32>
    %cst_61 = arith.constant 8.99999984E-4 : f32
    %331 = vector.broadcast %cst_61 : f32 to vector<16x16xf32>
    %332 = arith.addf %330, %331 : vector<16x16xf32>
    %333 = arith.mulf %329, %332 : vector<16x16xf32>
    %334 = tpu.reciprocal %333 {approx = true} : vector<16x16xf32> -> vector<16x16xf32>
    %335 = arith.mulf %324, %334 : vector<16x16xf32>
    %336 = arith.mulf %335, %151 : vector<16x16xf32>
    %337 = vector.shape_cast %336 : vector<16x16xf32> to vector<1x16x16xf32>
    %cst_62 = arith.constant dense<0.000000e+00> : vector<1xf32>
    %338 = vector.multi_reduction <add>, %337, %cst_62 [1, 2] : vector<1x16x16xf32> to vector<1xf32>
    %339 = vector.shape_cast %338 : vector<1xf32> to vector<1x1x1xf32>
    %340 = vector.extract %339[0, 0, 0] : f32 from vector<1x1x1xf32>
    %341 = arith.addf %303, %340 : f32
    %342 = vector.extract_strided_slice %136 {offsets = [400, 0], sizes = [16, 16], strides = [1, 1]} : vector<480x16xf32> to vector<16x16xf32>
    %343 = vector.extract_strided_slice %136 {offsets = [416, 0], sizes = [16, 16], strides = [1, 1]} : vector<480x16xf32> to vector<16x16xf32>
    %344 = vector.extract_strided_slice %136 {offsets = [432, 0], sizes = [16, 16], strides = [1, 1]} : vector<480x16xf32> to vector<16x16xf32>
    %345 = vector.extract_strided_slice %136 {offsets = [448, 0], sizes = [16, 16], strides = [1, 1]} : vector<480x16xf32> to vector<16x16xf32>
    %346 = vector.extract_strided_slice %136 {offsets = [464, 0], sizes = [16, 16], strides = [1, 1]} : vector<480x16xf32> to vector<16x16xf32>
    %347 = arith.mulf %342, %342 : vector<16x16xf32>
    %348 = arith.subf %344, %347 : vector<16x16xf32>
    %349 = arith.mulf %343, %343 : vector<16x16xf32>
    %350 = arith.subf %345, %349 : vector<16x16xf32>
    %351 = arith.mulf %342, %343 : vector<16x16xf32>
    %352 = arith.subf %346, %351 : vector<16x16xf32>
    %cst_63 = arith.constant 2.000000e+00 : f32
    %353 = vector.broadcast %cst_63 : f32 to vector<16x16xf32>
    %354 = arith.mulf %353, %342 : vector<16x16xf32>
    %355 = arith.mulf %354, %343 : vector<16x16xf32>
    %cst_64 = arith.constant 9.99999974E-5 : f32
    %356 = vector.broadcast %cst_64 : f32 to vector<16x16xf32>
    %357 = arith.addf %355, %356 : vector<16x16xf32>
    %cst_65 = arith.constant 2.000000e+00 : f32
    %358 = vector.broadcast %cst_65 : f32 to vector<16x16xf32>
    %359 = arith.mulf %358, %352 : vector<16x16xf32>
    %cst_66 = arith.constant 8.99999984E-4 : f32
    %360 = vector.broadcast %cst_66 : f32 to vector<16x16xf32>
    %361 = arith.addf %359, %360 : vector<16x16xf32>
    %362 = arith.mulf %357, %361 : vector<16x16xf32>
    %363 = arith.mulf %342, %342 : vector<16x16xf32>
    %364 = arith.mulf %343, %343 : vector<16x16xf32>
    %365 = arith.addf %363, %364 : vector<16x16xf32>
    %cst_67 = arith.constant 9.99999974E-5 : f32
    %366 = vector.broadcast %cst_67 : f32 to vector<16x16xf32>
    %367 = arith.addf %365, %366 : vector<16x16xf32>
    %368 = arith.addf %348, %350 : vector<16x16xf32>
    %cst_68 = arith.constant 8.99999984E-4 : f32
    %369 = vector.broadcast %cst_68 : f32 to vector<16x16xf32>
    %370 = arith.addf %368, %369 : vector<16x16xf32>
    %371 = arith.mulf %367, %370 : vector<16x16xf32>
    %372 = tpu.reciprocal %371 {approx = true} : vector<16x16xf32> -> vector<16x16xf32>
    %373 = arith.mulf %362, %372 : vector<16x16xf32>
    %374 = arith.mulf %373, %151 : vector<16x16xf32>
    %375 = vector.shape_cast %374 : vector<16x16xf32> to vector<1x16x16xf32>
    %cst_69 = arith.constant dense<0.000000e+00> : vector<1xf32>
    %376 = vector.multi_reduction <add>, %375, %cst_69 [1, 2] : vector<1x16x16xf32> to vector<1xf32>
    %377 = vector.shape_cast %376 : vector<1xf32> to vector<1x1x1xf32>
    %378 = vector.extract %377[0, 0, 0] : f32 from vector<1x1x1xf32>
    %379 = arith.addf %341, %378 : f32
    %380 = tpu.iota {dimensions = array<i32: 2>} : vector<1x8x128xi32>
    %c0_i32 = arith.constant 0 : i32
    %381 = vector.broadcast %c0_i32 : i32 to vector<1x8x128xi32>
    %382 = arith.cmpi eq, %380, %381 : vector<1x8x128xi32>
    %cst_70 = arith.constant 0.000000e+00 : f32
    %383 = vector.broadcast %39 : f32 to vector<1x8x128xf32>
    %384 = vector.broadcast %cst_70 : f32 to vector<1x8x128xf32>
    %385 = arith.select %382, %383, %384 : vector<1x8x128xi1>, vector<1x8x128xf32>
    %c1_i32 = arith.constant 1 : i32
    %386 = vector.broadcast %c1_i32 : i32 to vector<1x8x128xi32>
    %387 = arith.cmpi eq, %380, %386 : vector<1x8x128xi32>
    %cst_71 = arith.constant 0.000000e+00 : f32
    %388 = vector.broadcast %44 : f32 to vector<1x8x128xf32>
    %389 = vector.broadcast %cst_71 : f32 to vector<1x8x128xf32>
    %390 = arith.select %387, %388, %389 : vector<1x8x128xi1>, vector<1x8x128xf32>
    %391 = arith.addf %385, %390 : vector<1x8x128xf32>
    %c2_i32 = arith.constant 2 : i32
    %392 = vector.broadcast %c2_i32 : i32 to vector<1x8x128xi32>
    %393 = arith.cmpi eq, %380, %392 : vector<1x8x128xi32>
    %cst_72 = arith.constant 0.000000e+00 : f32
    %394 = vector.broadcast %49 : f32 to vector<1x8x128xf32>
    %395 = vector.broadcast %cst_72 : f32 to vector<1x8x128xf32>
    %396 = arith.select %393, %394, %395 : vector<1x8x128xi1>, vector<1x8x128xf32>
    %397 = arith.addf %391, %396 : vector<1x8x128xf32>
    %c3_i32 = arith.constant 3 : i32
    %398 = vector.broadcast %c3_i32 : i32 to vector<1x8x128xi32>
    %399 = arith.cmpi eq, %380, %398 : vector<1x8x128xi32>
    %cst_73 = arith.constant 0.000000e+00 : f32
    %400 = vector.broadcast %54 : f32 to vector<1x8x128xf32>
    %401 = vector.broadcast %cst_73 : f32 to vector<1x8x128xf32>
    %402 = arith.select %399, %400, %401 : vector<1x8x128xi1>, vector<1x8x128xf32>
    %403 = arith.addf %397, %402 : vector<1x8x128xf32>
    %c4_i32 = arith.constant 4 : i32
    %404 = vector.broadcast %c4_i32 : i32 to vector<1x8x128xi32>
    %405 = arith.cmpi eq, %380, %404 : vector<1x8x128xi32>
    %cst_74 = arith.constant 0.000000e+00 : f32
    %406 = vector.broadcast %379 : f32 to vector<1x8x128xf32>
    %407 = vector.broadcast %cst_74 : f32 to vector<1x8x128xf32>
    %408 = arith.select %405, %406, %407 : vector<1x8x128xi1>, vector<1x8x128xf32>
    %409 = arith.addf %403, %408 : vector<1x8x128xf32>
    %c0_75 = arith.constant 0 : index
    %c0_76 = arith.constant 0 : index
    %c0_77 = arith.constant 0 : index
    %410 = vector.load %arg5[%c0_75, %c0_76, %c0_77] : memref<1x8x128xf32, #tpu.memory_space<vmem>>, vector<1x8x128xf32>
    tpu.vector_store %arg5[%c0_75, %c0_76, %c0_77], %409 {strides = array<i32>} : memref<1x8x128xf32, #tpu.memory_space<vmem>>, vector<1x8x128xf32>,
    return
  }
  func.func @transform_0(%arg0: i32) -> (i32, i32, i32, i32) {
    %c0_i32 = arith.constant 0 : i32
    %c0_i32_0 = arith.constant 0 : i32
    %c0_i32_1 = arith.constant 0 : i32
    %c0_i32_2 = arith.constant 0 : i32
    return %arg0, %c0_i32, %c0_i32_0, %c0_i32_1 : i32, i32, i32, i32
  }
  func.func @transform_1(%arg0: i32) -> (i32, i32, i32, i32) {
    %c0_i32 = arith.constant 0 : i32
    %c0_i32_0 = arith.constant 0 : i32
    %c0_i32_1 = arith.constant 0 : i32
    %c0_i32_2 = arith.constant 0 : i32
    return %arg0, %c0_i32, %c0_i32_0, %c0_i32_1 : i32, i32, i32, i32
  }
  func.func @transform_2(%arg0: i32) -> (i32, i32) {
    %c0_i32 = arith.constant 0 : i32
    %c0_i32_0 = arith.constant 0 : i32
    %c0_i32_1 = arith.constant 0 : i32
    return %c0_i32, %c0_i32_0 : i32, i32
  }
  func.func @transform_3(%arg0: i32) -> (i32, i32) {
    %c0_i32 = arith.constant 0 : i32
    %c0_i32_0 = arith.constant 0 : i32
    %c0_i32_1 = arith.constant 0 : i32
    return %c0_i32, %c0_i32_0 : i32, i32
  }
  func.func @transform_4(%arg0: i32) -> (i32, i32, i32) {
    %c0_i32 = arith.constant 0 : i32
    %c0_i32_0 = arith.constant 0 : i32
    %c0_i32_1 = arith.constant 0 : i32
    return %arg0, %c0_i32, %c0_i32_0 : i32, i32, i32
  }
}

</mosaic_0001>

<llo_original>
// kernel: tpu_custom_call.1
$region0: #{tpu_custom_call.1}
  #allocation0 [shape = 'u32[]', space=smem, size = 0x4, offset = 0x4, fixed_abs, tag = 'smem constant byte address 0x4 - core index']
  #allocation1 [shape = 'u32[144,128]{1,0:T(1,128)}', space=vmem, size = 0x12000, scoped, tag = 'internal scratch']
  %s0 = inlined_call_operand.hbm [shape: f32[2,3,16,16], index: 0, kind: input, shape index: {}]
  %s1 = inlined_call_operand.hbm [shape: f32[2,3,16,16], index: 1, kind: input, shape index: {}]
  %s2 = inlined_call_operand.hbm [shape: bf16[16,16], index: 2, kind: input, shape index: {}]
  %s3 = inlined_call_operand.vmem [shape: bf16[16,16], index: 3, kind: input, shape index: {}]
  %s4 = inlined_call_operand.hbm [shape: f32[1,8,128], index: 4, kind: output, shape index: {}]
  %s5 = sld [smem:[#allocation0]]
  $region38: #{tpu_custom_call.1} parent=0
    _
  %s7 = ssub.s32 1, %s5
  %s8 = scalar_select 0, %s7, %s5
  $region1: #{tpu_custom_call.1} parent=0
    #allocation2 [shape = 'u8[49152]{0}', space=vmem, size = 0xc000, scoped, tag = 'input window, operand 0, single buffered']
    #allocation3 [shape = 's32[1]{0}', space=sflag, size = 0x4, scoped, tag = 'scoped memory for tpu_custom_call.1']
    #allocation4 [shape = 's32[1]{0}', space=sflag, size = 0x4, scoped, tag = 'scoped memory for tpu_custom_call.1']
    #allocation5 [shape = 'u8[49152]{0}', space=vmem, size = 0xc000, scoped, tag = 'input window, operand 1, single buffered']
    #allocation6 [shape = 's32[1]{0}', space=sflag, size = 0x4, scoped, tag = 'scoped memory for tpu_custom_call.1']
    #allocation7 [shape = 'u8[4096]{0}', space=vmem, size = 0x1000, scoped, tag = 'input window, operand 2, single buffered']
    #allocation8 [shape = 'u8[4096]{0}', space=vmem, size = 0x1000, scoped, tag = 'output window, operand 0, single buffered']
    %9 = vsyncpa [#allocation3], 0
    %10 = vsyncpa [#allocation6], 0
    %11 = vsyncpa [#allocation4], 0
    // Predicated region
    $region2: #{tpu_custom_call.1} parent=1 // pred_check
      _
    $region3: #{tpu_custom_call.1} parent=1 // pred_check_branch
      %13 = sbr.rel (0) target = $region5
    $region4: #{tpu_custom_call.1} parent=1 // pred_region
      %s15 = ssub.s32 1536, 1536
      %16 = vsyncadd [#allocation3], %s15
      %s17 = sshll.u32 [#allocation2], 4
      %s18 = int_to_ptr.vmem [resolvable:$true] %s17
      %23 = dma.hbm_to_vmem [thread:$0]  %s0, 1536, %s18, [#allocation3], 128, 128, 8
    $region5: #{tpu_custom_call.1} parent=1 // pred_fallthru
      _
    // Predicated region
    $region6: #{tpu_custom_call.1} parent=1 // pred_check
      _
    $region7: #{tpu_custom_call.1} parent=1 // pred_check_branch
      %25 = sbr.rel (0) target = $region9
    $region8: #{tpu_custom_call.1} parent=1 // pred_region
      %s27 = ssub.s32 1536, 1536
      %28 = vsyncadd [#allocation6], %s27
      %s29 = sshll.u32 [#allocation5], 4
      %s30 = int_to_ptr.vmem [resolvable:$true] %s29
      %35 = dma.hbm_to_vmem [thread:$0]  %s1, 1536, %s30, [#allocation6], 128, 128, 8
    $region9: #{tpu_custom_call.1} parent=1 // pred_fallthru
      _
    // Predicated region
    $region10: #{tpu_custom_call.1} parent=1 // pred_check
      _
    $region11: #{tpu_custom_call.1} parent=1 // pred_check_branch
      %37 = sbr.rel (0) target = $region13
    $region12: #{tpu_custom_call.1} parent=1 // pred_region
      %s39 = ssub.s32 128, 128
      %40 = vsyncadd [#allocation6], %s39
      %s41 = sshll.u32 [#allocation7], 4
      %s42 = int_to_ptr.vmem [resolvable:$true] %s41
      %47 = dma.hbm_to_vmem [thread:$0]  %s2, 128, %s42, [#allocation6], 64, 64, 4
    $region13: #{tpu_custom_call.1} parent=1 // pred_fallthru
      _
    // Predicated region
    $region14: #{tpu_custom_call.1} parent=1 // pred_check
      _
    $region15: #{tpu_custom_call.1} parent=1 // pred_check_branch
      %49 = sbr.rel (0) target = $region17
    $region16: #{tpu_custom_call.1} parent=1 // pred_region
      _
    $region17: #{tpu_custom_call.1} parent=1 // pred_fallthru
      _
    // Predicated region
    $region18: #{tpu_custom_call.1} parent=1 // pred_check
      _
    $region19: #{tpu_custom_call.1} parent=1 // pred_check_branch
      %51 = sbr.rel (0) target = $region21
    $region20: #{tpu_custom_call.1} parent=1 // pred_region
      %52 = dma.done [#allocation3], 1536
    $region21: #{tpu_custom_call.1} parent=1 // pred_fallthru
      _
    // Predicated region
    $region22: #{tpu_custom_call.1} parent=1 // pred_check
      _
    $region23: #{tpu_custom_call.1} parent=1 // pred_check_branch
      %54 = sbr.rel (0) target = $region25
    $region24: #{tpu_custom_call.1} parent=1 // pred_region
      %55 = dma.done [#allocation6], 1536
    $region25: #{tpu_custom_call.1} parent=1 // pred_fallthru
      _
    // Predicated region
    $region26: #{tpu_custom_call.1} parent=1 // pred_check
      _
    $region27: #{tpu_custom_call.1} parent=1 // pred_check_branch
      %57 = sbr.rel (0) target = $region29
    $region28: #{tpu_custom_call.1} parent=1 // pred_region
      %58 = dma.done [#allocation6], 128
    $region29: #{tpu_custom_call.1} parent=1 // pred_fallthru
      _
    %v60 = vld [vmem:[#allocation2] sm:$0xff]
    %v61 = vld [vmem:[#allocation2 + $0x8] sm:$0xff]
    %v62 = vld [vmem:[#allocation2 + $0x10] sm:$0xff]
    %v63 = vld [vmem:[#allocation2 + $0x18] sm:$0xff]
    %v64 = vld [vmem:[#allocation2 + $0x20] sm:$0xff]
    %v65 = vld [vmem:[#allocation2 + $0x28] sm:$0xff]
    %v66 = vld [vmem:[#allocation2 + $0x30] sm:$0xff]
    %v67 = vld [vmem:[#allocation2 + $0x38] sm:$0xff]
    %v68 = vld [vmem:[#allocation2 + $0x40] sm:$0xff]
    %v69 = vld [vmem:[#allocation2 + $0x48] sm:$0xff]
    %v70 = vld [vmem:[#allocation2 + $0x50] sm:$0xff]
    %v71 = vld [vmem:[#allocation2 + $0x58] sm:$0xff]
    %v72 = vld [vmem:[#allocation5] sm:$0xff]
    %v73 = vld [vmem:[#allocation5 + $0x8] sm:$0xff]
    %v74 = vld [vmem:[#allocation5 + $0x10] sm:$0xff]
    %v75 = vld [vmem:[#allocation5 + $0x18] sm:$0xff]
    %v76 = vld [vmem:[#allocation5 + $0x20] sm:$0xff]
    %v77 = vld [vmem:[#allocation5 + $0x28] sm:$0xff]
    %v78 = vld [vmem:[#allocation5 + $0x30] sm:$0xff]
    %v79 = vld [vmem:[#allocation5 + $0x38] sm:$0xff]
    %v80 = vld [vmem:[#allocation5 + $0x40] sm:$0xff]
    %v81 = vld [vmem:[#allocation5 + $0x48] sm:$0xff]
    %v82 = vld [vmem:[#allocation5 + $0x50] sm:$0xff]
    %v83 = vld [vmem:[#allocation5 + $0x58] sm:$0xff]
    %v84 = vld [vmem:[#allocation7] sm:$0xf]
    %v85 = vld [vmem:[#allocation7 + $0x4] sm:$0xf]
    %v86 = vld [vmem:[%s3] sm:$0xf]
    %v87 = vld [vmem:[%s3 + $0x4] sm:$0xf]
    %v88 = vsub.f32 %v60, %v72
    %v89 = vsub.f32 %v61, %v73
    %v90 = vsub.f32 %v62, %v74
    %v91 = vsub.f32 %v63, %v75
    %v92 = vsub.f32 %v64, %v76
    %v93 = vsub.f32 %v65, %v77
    %v94 = vsub.f32 %v66, %v78
    %v95 = vsub.f32 %v67, %v79
    %v96 = vsub.f32 %v68, %v80
    %v97 = vsub.f32 %v69, %v81
    %v98 = vsub.f32 %v70, %v82
    %v99 = vsub.f32 %v71, %v83
    %v100 = vmul.f32 %v88, 0.299
    %v101 = vmul.f32 %v89, 0.299
    %v102 = vmul.f32 %v94, 0.299
    %v103 = vmul.f32 %v95, 0.299
    %v104 = vmul.f32 %v90, 0.587
    %v105 = vmul.f32 %v91, 0.587
    %v106 = vmul.f32 %v96, 0.587
    %v107 = vmul.f32 %v97, 0.587
    %v108 = vadd.f32 %v100, %v104
    %v109 = vadd.f32 %v101, %v105
    %v110 = vadd.f32 %v102, %v106
    %v111 = vadd.f32 %v103, %v107
    %v112 = vmul.f32 %v92, 0.114
    %v113 = vmul.f32 %v93, 0.114
    %v114 = vmul.f32 %v98, 0.114
    %v115 = vmul.f32 %v99, 0.114
    %v116 = vadd.f32 %v108, %v112
    %v117 = vadd.f32 %v109, %v113
    %v118 = vadd.f32 %v110, %v114
    %v119 = vadd.f32 %v111, %v115
    %v120 = vmul.f32 %v88, -0.147
    %v121 = vmul.f32 %v89, -0.147
    %v122 = vmul.f32 %v94, -0.147
    %v123 = vmul.f32 %v95, -0.147
    %v124 = vmul.f32 %v90, 0.289
    %v125 = vmul.f32 %v91, 0.289
    %v126 = vmul.f32 %v96, 0.289
    %v127 = vmul.f32 %v97, 0.289
    %v128 = vsub.f32 %v120, %v124
    %v129 = vsub.f32 %v121, %v125
    %v130 = vsub.f32 %v122, %v126
    %v131 = vsub.f32 %v123, %v127
    %v132 = vmul.f32 %v92, 0.436
    %v133 = vmul.f32 %v93, 0.436
    %v134 = vmul.f32 %v98, 0.436
    %v135 = vmul.f32 %v99, 0.436
    %v136 = vadd.f32 %v128, %v132
    %v137 = vadd.f32 %v129, %v133
    %v138 = vadd.f32 %v130, %v134
    %v139 = vadd.f32 %v131, %v135
    %v140 = vmul.f32 %v88, 0.615
    %v141 = vmul.f32 %v89, 0.615
    %v142 = vmul.f32 %v94, 0.615
    %v143 = vmul.f32 %v95, 0.615
    %v144 = vmul.f32 %v90, 0.515
    %v145 = vmul.f32 %v91, 0.515
    %v146 = vmul.f32 %v96, 0.515
    %v147 = vmul.f32 %v97, 0.515
    %v148 = vsub.f32 %v140, %v144
    %v149 = vsub.f32 %v141, %v145
    %v150 = vsub.f32 %v142, %v146
    %v151 = vsub.f32 %v143, %v147
    %v152 = vmul.f32 %v92, 0.1
    %v153 = vmul.f32 %v93, 0.1
    %v154 = vmul.f32 %v98, 0.1
    %v155 = vmul.f32 %v99, 0.1
    %v156 = vsub.f32 %v148, %v152
    %v157 = vsub.f32 %v149, %v153
    %v158 = vsub.f32 %v150, %v154
    %v159 = vsub.f32 %v151, %v155
    %v160 = vmul.f32 %v116, %v116
    %v161 = vmul.f32 %v117, %v117
    %v162 = vmul.f32 %v118, %v118
    %v163 = vmul.f32 %v119, %v119
    %vm164 = vcmask 130048
    %v165 = vsel %vm164, %v160, 0.0
    %v166 = vsel %vm164, %v161, 0.0
    %v167 = vadd.f32 %v165, %v166
    %v168 = vsel %vm164, %v162, 0.0
    %v169 = vadd.f32 %v167, %v168
    %v170 = vsel %vm164, %v163, 0.0
    %v171 = vadd.f32 %v169, %v170
    %172 = vadd.xlane.f32.xlu0 %v171
    %v173 = vpop.xlane.xlu0 %172
    %v174 = vrot.slane %v173, 4
    %v175 = vadd.f32 %v173, %v174
    %v176 = vrot.slane %v175, 2
    %v177 = vadd.f32 %v175, %v176
    %v178 = vrot.slane %v177, 1
    %v179 = vadd.f32 %v177, %v178
    %s180 = vtos %v179
    %v181 = vmul.f32 %v136, %v136
    %v182 = vmul.f32 %v137, %v137
    %v183 = vmul.f32 %v138, %v138
    %v184 = vmul.f32 %v139, %v139
    %v185 = vsel %vm164, %v181, 0.0
    %v186 = vsel %vm164, %v182, 0.0
    %v187 = vadd.f32 %v185, %v186
    %v188 = vsel %vm164, %v183, 0.0
    %v189 = vadd.f32 %v187, %v188
    %v190 = vsel %vm164, %v184, 0.0
    %v191 = vadd.f32 %v189, %v190
    %192 = vadd.xlane.f32.xlu0 %v191
    %v193 = vpop.xlane.xlu0 %192
    %v194 = vrot.slane %v193, 4
    %v195 = vadd.f32 %v193, %v194
    %v196 = vrot.slane %v195, 2
    %v197 = vadd.f32 %v195, %v196
    %v198 = vrot.slane %v197, 1
    %v199 = vadd.f32 %v197, %v198
    %s200 = vtos %v199
    %v201 = vmul.f32 %v156, %v156
    %v202 = vmul.f32 %v157, %v157
    %v203 = vmul.f32 %v158, %v158
    %v204 = vmul.f32 %v159, %v159
    %v205 = vsel %vm164, %v201, 0.0
    %v206 = vsel %vm164, %v202, 0.0
    %v207 = vadd.f32 %v205, %v206
    %v208 = vsel %vm164, %v203, 0.0
    %v209 = vadd.f32 %v207, %v208
    %v210 = vsel %vm164, %v204, 0.0
    %v211 = vadd.f32 %v209, %v210
    %212 = vadd.xlane.f32.xlu0 %v211
    %v213 = vpop.xlane.xlu0 %212
    %v214 = vrot.slane %v213, 4
    %v215 = vadd.f32 %v213, %v214
    %v216 = vrot.slane %v215, 2
    %v217 = vadd.f32 %v215, %v216
    %v218 = vrot.slane %v217, 1
    %v219 = vadd.f32 %v217, %v218
    %s220 = vtos %v219
    %v221 = vand.u32 2147483647, %v88
    %v222 = vand.u32 2147483647, %v89
    %v223 = vand.u32 2147483647, %v90
    %v224 = vand.u32 2147483647, %v91
    %v225 = vand.u32 2147483647, %v92
    %v226 = vand.u32 2147483647, %v93
    %v227 = vand.u32 2147483647, %v94
    %v228 = vand.u32 2147483647, %v95
    %v229 = vand.u32 2147483647, %v96
    %v230 = vand.u32 2147483647, %v97
    %v231 = vand.u32 2147483647, %v98
    %v232 = vand.u32 2147483647, %v99
    %v233 = vsel %vm164, %v221, 0.0
    %v234 = vsel %vm164, %v222, 0.0
    %v235 = vadd.f32 %v233, %v234
    %v236 = vsel %vm164, %v223, 0.0
    %v237 = vadd.f32 %v235, %v236
    %v238 = vsel %vm164, %v224, 0.0
    %v239 = vadd.f32 %v237, %v238
    %v240 = vsel %vm164, %v225, 0.0
    %v241 = vadd.f32 %v239, %v240
    %v242 = vsel %vm164, %v226, 0.0
    %v243 = vadd.f32 %v241, %v242
    %v244 = vsel %vm164, %v227, 0.0
    %v245 = vadd.f32 %v243, %v244
    %v246 = vsel %vm164, %v228, 0.0
    %v247 = vadd.f32 %v245, %v246
    %v248 = vsel %vm164, %v229, 0.0
    %v249 = vadd.f32 %v247, %v248
    %v250 = vsel %vm164, %v230, 0.0
    %v251 = vadd.f32 %v249, %v250
    %v252 = vsel %vm164, %v231, 0.0
    %v253 = vadd.f32 %v251, %v252
    %v254 = vsel %vm164, %v232, 0.0
    %v255 = vadd.f32 %v253, %v254
    %256 = vadd.xlane.f32.xlu0 %v255
    %v257 = vpop.xlane.xlu0 %256
    %v258 = vrot.slane %v257, 4
    %v259 = vadd.f32 %v257, %v258
    %v260 = vrot.slane %v259, 2
    %v261 = vadd.f32 %v259, %v260
    %v262 = vrot.slane %v261, 1
    %v263 = vadd.f32 %v261, %v262
    %s264 = vtos %v263
    %v265 = vmul.f32 %v60, %v60
    %v266 = vmul.f32 %v61, %v61
    %v267 = vmul.f32 %v72, %v72
    %v268 = vmul.f32 %v73, %v73
    %v269 = vmul.f32 %v60, %v72
    %v270 = vmul.f32 %v61, %v73
    %v271 = vmul.f32 %v62, %v62
    %v272 = vmul.f32 %v63, %v63
    %v273 = vmul.f32 %v74, %v74
    %v274 = vmul.f32 %v75, %v75
    %v275 = vmul.f32 %v62, %v74
    %v276 = vmul.f32 %v63, %v75
    %v277 = vmul.f32 %v64, %v64
    %v278 = vmul.f32 %v65, %v65
    %v279 = vmul.f32 %v76, %v76
    %v280 = vmul.f32 %v77, %v77
    %v281 = vmul.f32 %v64, %v76
    %v282 = vmul.f32 %v65, %v77
    %v283 = vmul.f32 %v66, %v66
    %v284 = vmul.f32 %v67, %v67
    %v285 = vmul.f32 %v78, %v78
    %v286 = vmul.f32 %v79, %v79
    %v287 = vmul.f32 %v66, %v78
    %v288 = vmul.f32 %v67, %v79
    %v289 = vmul.f32 %v68, %v68
    %v290 = vmul.f32 %v69, %v69
    %v291 = vmul.f32 %v80, %v80
    %v292 = vmul.f32 %v81, %v81
    %v293 = vmul.f32 %v68, %v80
    %v294 = vmul.f32 %v69, %v81
    %v295 = vmul.f32 %v70, %v70
    %v296 = vmul.f32 %v71, %v71
    %v297 = vmul.f32 %v82, %v82
    %v298 = vmul.f32 %v83, %v83
    %v299 = vmul.f32 %v70, %v82
    %v300 = vmul.f32 %v71, %v83
    %303 = vrot.lane.b32.xlu0 %v72, 16
    %v304 = vpop.permute.xlu0 %303
    %305 = vrot.lane.b32.xlu0 %v73, 16
    %v306 = vpop.permute.xlu0 %305
    %311 = vrot.lane.b32.xlu0 %v265, 32
    %v312 = vpop.permute.xlu0 %311
    %313 = vrot.lane.b32.xlu0 %v266, 32
    %v314 = vpop.permute.xlu0 %313
    %319 = vrot.lane.b32.xlu0 %v267, 48
    %v320 = vpop.permute.xlu0 %319
    %321 = vrot.lane.b32.xlu0 %v268, 48
    %v322 = vpop.permute.xlu0 %321
    %327 = vrot.lane.b32.xlu0 %v269, 64
    %v328 = vpop.permute.xlu0 %327
    %329 = vrot.lane.b32.xlu0 %v270, 64
    %v330 = vpop.permute.xlu0 %329
    %335 = vrot.lane.b32.xlu0 %v62, 80
    %v336 = vpop.permute.xlu0 %335
    %337 = vrot.lane.b32.xlu0 %v63, 80
    %v338 = vpop.permute.xlu0 %337
    %343 = vrot.lane.b32.xlu0 %v74, 96
    %v344 = vpop.permute.xlu0 %343
    %345 = vrot.lane.b32.xlu0 %v75, 96
    %v346 = vpop.permute.xlu0 %345
    %351 = vrot.lane.b32.xlu0 %v271, 112
    %v352 = vpop.permute.xlu0 %351
    %353 = vrot.lane.b32.xlu0 %v272, 112
    %v354 = vpop.permute.xlu0 %353
    %359 = vrot.lane.b32.xlu0 %v275, 16
    %v360 = vpop.permute.xlu0 %359
    %361 = vrot.lane.b32.xlu0 %v276, 16
    %v362 = vpop.permute.xlu0 %361
    %367 = vrot.lane.b32.xlu0 %v64, 32
    %v368 = vpop.permute.xlu0 %367
    %369 = vrot.lane.b32.xlu0 %v65, 32
    %v370 = vpop.permute.xlu0 %369
    %375 = vrot.lane.b32.xlu0 %v76, 48
    %v376 = vpop.permute.xlu0 %375
    %377 = vrot.lane.b32.xlu0 %v77, 48
    %v378 = vpop.permute.xlu0 %377
    %383 = vrot.lane.b32.xlu0 %v277, 64
    %v384 = vpop.permute.xlu0 %383
    %385 = vrot.lane.b32.xlu0 %v278, 64
    %v386 = vpop.permute.xlu0 %385
    %391 = vrot.lane.b32.xlu0 %v279, 80
    %v392 = vpop.permute.xlu0 %391
    %393 = vrot.lane.b32.xlu0 %v280, 80
    %v394 = vpop.permute.xlu0 %393
    %399 = vrot.lane.b32.xlu0 %v281, 96
    %v400 = vpop.permute.xlu0 %399
    %401 = vrot.lane.b32.xlu0 %v282, 96
    %v402 = vpop.permute.xlu0 %401
    %407 = vrot.lane.b32.xlu0 %v66, 112
    %v408 = vpop.permute.xlu0 %407
    %409 = vrot.lane.b32.xlu0 %v67, 112
    %v410 = vpop.permute.xlu0 %409
    %v413 = vsel %vm164, %v60, %v304
    %v414 = vsel %vm164, %v61, %v306
    %vm415 = vcmask 261120
    %v416 = vsel %vm415, %v413, %v312
    %v417 = vsel %vm415, %v414, %v314
    %vm418 = vcmask 392192
    %v419 = vsel %vm418, %v416, %v320
    %v420 = vsel %vm418, %v417, %v322
    %vm421 = vcmask 523264
    %v422 = vsel %vm421, %v419, %v328
    %v423 = vsel %vm421, %v420, %v330
    %vm424 = vcmask 654336
    %v425 = vsel %vm424, %v422, %v336
    %v426 = vsel %vm424, %v423, %v338
    %vm427 = vcmask 785408
    %v428 = vsel %vm427, %v425, %v344
    %v429 = vsel %vm427, %v426, %v346
    %vm430 = vcmask 916480
    %v431 = vsel %vm430, %v428, %v352
    %v432 = vsel %vm430, %v429, %v354
    %v433 = vsel %vm164, %v273, %v360
    %v434 = vsel %vm164, %v274, %v362
    %v435 = vsel %vm415, %v433, %v368
    %v436 = vsel %vm415, %v434, %v370
    %v437 = vsel %vm418, %v435, %v376
    %v438 = vsel %vm418, %v436, %v378
    %v439 = vsel %vm421, %v437, %v384
    %v440 = vsel %vm421, %v438, %v386
    %v441 = vsel %vm424, %v439, %v392
    %v442 = vsel %vm424, %v440, %v394
    %v443 = vsel %vm427, %v441, %v400
    %v444 = vsel %vm427, %v442, %v402
    %v445 = vsel %vm430, %v443, %v408
    %v446 = vsel %vm430, %v444, %v410
    %449 = vrot.lane.b32.xlu0 %v283, 16
    %v450 = vpop.permute.xlu0 %449
    %451 = vrot.lane.b32.xlu0 %v284, 16
    %v452 = vpop.permute.xlu0 %451
    %457 = vrot.lane.b32.xlu0 %v285, 32
    %v458 = vpop.permute.xlu0 %457
    %459 = vrot.lane.b32.xlu0 %v286, 32
    %v460 = vpop.permute.xlu0 %459
    %465 = vrot.lane.b32.xlu0 %v287, 48
    %v466 = vpop.permute.xlu0 %465
    %467 = vrot.lane.b32.xlu0 %v288, 48
    %v468 = vpop.permute.xlu0 %467
    %473 = vrot.lane.b32.xlu0 %v68, 64
    %v474 = vpop.permute.xlu0 %473
    %475 = vrot.lane.b32.xlu0 %v69, 64
    %v476 = vpop.permute.xlu0 %475
    %481 = vrot.lane.b32.xlu0 %v80, 80
    %v482 = vpop.permute.xlu0 %481
    %483 = vrot.lane.b32.xlu0 %v81, 80
    %v484 = vpop.permute.xlu0 %483
    %489 = vrot.lane.b32.xlu0 %v289, 96
    %v490 = vpop.permute.xlu0 %489
    %491 = vrot.lane.b32.xlu0 %v290, 96
    %v492 = vpop.permute.xlu0 %491
    %497 = vrot.lane.b32.xlu0 %v291, 112
    %v498 = vpop.permute.xlu0 %497
    %499 = vrot.lane.b32.xlu0 %v292, 112
    %v500 = vpop.permute.xlu0 %499
    %505 = vrot.lane.b32.xlu0 %v70, 16
    %v506 = vpop.permute.xlu0 %505
    %507 = vrot.lane.b32.xlu0 %v71, 16
    %v508 = vpop.permute.xlu0 %507
    %513 = vrot.lane.b32.xlu0 %v82, 32
    %v514 = vpop.permute.xlu0 %513
    %515 = vrot.lane.b32.xlu0 %v83, 32
    %v516 = vpop.permute.xlu0 %515
    %521 = vrot.lane.b32.xlu0 %v295, 48
    %v522 = vpop.permute.xlu0 %521
    %523 = vrot.lane.b32.xlu0 %v296, 48
    %v524 = vpop.permute.xlu0 %523
    %529 = vrot.lane.b32.xlu0 %v297, 64
    %v530 = vpop.permute.xlu0 %529
    %531 = vrot.lane.b32.xlu0 %v298, 64
    %v532 = vpop.permute.xlu0 %531
    %537 = vrot.lane.b32.xlu0 %v299, 80
    %v538 = vpop.permute.xlu0 %537
    %539 = vrot.lane.b32.xlu0 %v300, 80
    %v540 = vpop.permute.xlu0 %539
    %v543 = vsel %vm164, %v78, %v450
    %v544 = vsel %vm164, %v79, %v452
    %v545 = vsel %vm415, %v543, %v458
    %v546 = vsel %vm415, %v544, %v460
    %v547 = vsel %vm418, %v545, %v466
    %v548 = vsel %vm418, %v546, %v468
    %v549 = vsel %vm421, %v547, %v474
    %v550 = vsel %vm421, %v548, %v476
    %v551 = vsel %vm424, %v549, %v482
    %v552 = vsel %vm424, %v550, %v484
    %v553 = vsel %vm427, %v551, %v490
    %v554 = vsel %vm427, %v552, %v492
    %v555 = vsel %vm430, %v553, %v498
    %v556 = vsel %vm430, %v554, %v500
    %v557 = vsel %vm164, %v293, %v506
    %v558 = vsel %vm164, %v294, %v508
    %v559 = vsel %vm415, %v557, %v514
    %v560 = vsel %vm415, %v558, %v516
    %v561 = vsel %vm418, %v559, %v522
    %v562 = vsel %vm418, %v560, %v524
    %v563 = vsel %vm421, %v561, %v530
    %v564 = vsel %vm421, %v562, %v532
    %v565 = vsel %vm424, %v563, %v538
    %v566 = vsel %vm424, %v564, %v540
    %v567 = vpack.c.bf16 %v432, %v431
    %v568 = vpack.c.bf16 %v446, %v445
    %v569 = vpack.c.bf16 %v556, %v555
    %v570 = vpack.c.bf16 %v566, %v565
    %v573 = vunpack.c.l.b16 %v84
    %v574 = vunpack.c.l.b16 %v85
    %v575 = vpack.c.b16 %v574, %v573
    %v577 = vsel %vm164, %v575, 0
    %579 = vmatprep.subr.bf16.mxu0 %v568
    %580 = vmatpush1.bf16.msra.mxu0 %v567
    %581 = vmatprep.subr.bf16.mxu0 0
    %582 = vmatpush1.bf16.msra.mxu0 0
    %583 = vmatprep.subr.bf16.mxu0 0
    %584 = vmatpush1.bf16.msra.mxu0 0
    %585 = vmatprep.subr.bf16.mxu0 0
    %586 = vmatpush1.bf16.msra.mxu0 0
    %587 = vmatprep.subr.bf16.mxu0 0
    %588 = vmatpush1.bf16.msra.mxu0 0
    %589 = vmatprep.subr.bf16.mxu0 0
    %590 = vmatpush1.bf16.msra.mxu0 0
    %591 = vmatprep.subr.bf16.mxu0 0
    %592 = vmatpush1.bf16.msra.mxu0 0
    %593 = vmatprep.subr.bf16.mxu0 0
    %594 = vmatpush1.bf16.msra.mxu0 0
    %595 = vmatprep.subr.bf16.mxu0 0
    %596 = vmatpush1.bf16.msra.mxu0 0
    %597 = vmatprep.subr.bf16.mxu0 0
    %598 = vmatpush1.bf16.msra.mxu0 0
    %599 = vmatprep.subr.bf16.mxu0 0
    %600 = vmatpush1.bf16.msra.mxu0 0
    %601 = vmatprep.subr.bf16.mxu0 0
    %602 = vmatpush1.bf16.msra.mxu0 0
    %603 = vmatprep.subr.bf16.mxu0 0
    %604 = vmatpush1.bf16.msra.mxu0 0
    %605 = vmatprep.subr.bf16.mxu0 0
    %606 = vmatpush1.bf16.msra.mxu0 0
    %607 = vmatprep.subr.bf16.mxu0 0
    %608 = vmatpush1.bf16.msra.mxu0 0
    %609 = vmatprep.subr.bf16.mxu0 0
    %610 = vmatpush1.bf16.msra.mxu0 0
    %611 = vmatprep.mubr.bf16.mxu0 0
    %612 = vmatmul.mubr.bf16.gmra.mrb[0].mxu0 %v577
    %v613 = vpop.f32.mrb[0].mxu0
    %v614 = vadd.f32 0.0, %v613
    %v615 = vpop.f32.mrb[0].mxu0
    %v616 = vadd.f32 0.0, %v615
    %v617 = vpop.f32.mrb[0].mxu0
    %v618 = vadd.f32 0.0, %v617
    %v619 = vpop.f32.mrb[0].mxu0
    %v620 = vadd.f32 0.0, %v619
    %621 = vdwg.mxu0
    %622 = vmatprep.subr.bf16.mxu0 %v570
    %623 = vmatpush1.bf16.msra.mxu0 %v569
    %624 = vmatprep.subr.bf16.mxu0 0
    %625 = vmatpush1.bf16.msra.mxu0 0
    %626 = vmatprep.subr.bf16.mxu0 0
    %627 = vmatpush1.bf16.msra.mxu0 0
    %628 = vmatprep.subr.bf16.mxu0 0
    %629 = vmatpush1.bf16.msra.mxu0 0
    %630 = vmatprep.subr.bf16.mxu0 0
    %631 = vmatpush1.bf16.msra.mxu0 0
    %632 = vmatprep.subr.bf16.mxu0 0
    %633 = vmatpush1.bf16.msra.mxu0 0
    %634 = vmatprep.subr.bf16.mxu0 0
    %635 = vmatpush1.bf16.msra.mxu0 0
    %636 = vmatprep.subr.bf16.mxu0 0
    %637 = vmatpush1.bf16.msra.mxu0 0
    %638 = vmatprep.subr.bf16.mxu0 0
    %639 = vmatpush1.bf16.msra.mxu0 0
    %640 = vmatprep.subr.bf16.mxu0 0
    %641 = vmatpush1.bf16.msra.mxu0 0
    %642 = vmatprep.subr.bf16.mxu0 0
    %643 = vmatpush1.bf16.msra.mxu0 0
    %644 = vmatprep.subr.bf16.mxu0 0
    %645 = vmatpush1.bf16.msra.mxu0 0
    %646 = vmatprep.subr.bf16.mxu0 0
    %647 = vmatpush1.bf16.msra.mxu0 0
    %648 = vmatprep.subr.bf16.mxu0 0
    %649 = vmatpush1.bf16.msra.mxu0 0
    %650 = vmatprep.subr.bf16.mxu0 0
    %651 = vmatpush1.bf16.msra.mxu0 0
    %652 = vmatprep.subr.bf16.mxu0 0
    %653 = vmatpush1.bf16.msra.mxu0 0
    %654 = vmatprep.mubr.bf16.mxu0 0
    %655 = vmatmul.mubr.bf16.gmra.mrb[0].mxu0 %v577
    %v656 = vpop.f32.mrb[0].mxu0
    %v657 = vadd.f32 0.0, %v656
    %v658 = vpop.f32.mrb[0].mxu0
    %v659 = vadd.f32 0.0, %v658
    %v660 = vpop.f32.mrb[0].mxu0
    %v661 = vadd.f32 0.0, %v660
    %v662 = vpop.f32.mrb[0].mxu0
    %v663 = vadd.f32 0.0, %v662
    %664 = vdwg.mxu0
    %667 = vrot.lane.b32.xlu0 %v614, 112
    %v668 = vpop.permute.xlu0 %667
    %669 = vrot.lane.b32.xlu0 %v618, 112
    %v670 = vpop.permute.xlu0 %669
    %673 = vrot.lane.b32.xlu0 %v614, 96
    %v674 = vpop.permute.xlu0 %673
    %675 = vrot.lane.b32.xlu0 %v618, 96
    %v676 = vpop.permute.xlu0 %675
    %679 = vrot.lane.b32.xlu0 %v614, 80
    %v680 = vpop.permute.xlu0 %679
    %681 = vrot.lane.b32.xlu0 %v618, 80
    %v682 = vpop.permute.xlu0 %681
    %685 = vrot.lane.b32.xlu0 %v614, 64
    %v686 = vpop.permute.xlu0 %685
    %687 = vrot.lane.b32.xlu0 %v618, 64
    %v688 = vpop.permute.xlu0 %687
    %691 = vrot.lane.b32.xlu0 %v614, 48
    %v692 = vpop.permute.xlu0 %691
    %693 = vrot.lane.b32.xlu0 %v618, 48
    %v694 = vpop.permute.xlu0 %693
    %697 = vrot.lane.b32.xlu0 %v614, 32
    %v698 = vpop.permute.xlu0 %697
    %699 = vrot.lane.b32.xlu0 %v618, 32
    %v700 = vpop.permute.xlu0 %699
    %703 = vrot.lane.b32.xlu0 %v614, 16
    %v704 = vpop.permute.xlu0 %703
    %705 = vrot.lane.b32.xlu0 %v618, 16
    %v706 = vpop.permute.xlu0 %705
    %711 = vrot.lane.b32.xlu0 %v616, 112
    %v712 = vpop.permute.xlu0 %711
    %713 = vrot.lane.b32.xlu0 %v620, 112
    %v714 = vpop.permute.xlu0 %713
    %717 = vrot.lane.b32.xlu0 %v616, 96
    %v718 = vpop.permute.xlu0 %717
    %719 = vrot.lane.b32.xlu0 %v620, 96
    %v720 = vpop.permute.xlu0 %719
    %723 = vrot.lane.b32.xlu0 %v616, 80
    %v724 = vpop.permute.xlu0 %723
    %725 = vrot.lane.b32.xlu0 %v620, 80
    %v726 = vpop.permute.xlu0 %725
    %729 = vrot.lane.b32.xlu0 %v616, 64
    %v730 = vpop.permute.xlu0 %729
    %731 = vrot.lane.b32.xlu0 %v620, 64
    %v732 = vpop.permute.xlu0 %731
    %735 = vrot.lane.b32.xlu0 %v616, 48
    %v736 = vpop.permute.xlu0 %735
    %737 = vrot.lane.b32.xlu0 %v620, 48
    %v738 = vpop.permute.xlu0 %737
    %741 = vrot.lane.b32.xlu0 %v616, 32
    %v742 = vpop.permute.xlu0 %741
    %743 = vrot.lane.b32.xlu0 %v620, 32
    %v744 = vpop.permute.xlu0 %743
    %747 = vrot.lane.b32.xlu0 %v616, 16
    %v748 = vpop.permute.xlu0 %747
    %749 = vrot.lane.b32.xlu0 %v620, 16
    %v750 = vpop.permute.xlu0 %749
    %755 = vrot.lane.b32.xlu0 %v657, 112
    %v756 = vpop.permute.xlu0 %755
    %757 = vrot.lane.b32.xlu0 %v661, 112
    %v758 = vpop.permute.xlu0 %757
    %761 = vrot.lane.b32.xlu0 %v657, 96
    %v762 = vpop.permute.xlu0 %761
    %763 = vrot.lane.b32.xlu0 %v661, 96
    %v764 = vpop.permute.xlu0 %763
    %767 = vrot.lane.b32.xlu0 %v657, 80
    %v768 = vpop.permute.xlu0 %767
    %769 = vrot.lane.b32.xlu0 %v661, 80
    %v770 = vpop.permute.xlu0 %769
    %773 = vrot.lane.b32.xlu0 %v657, 64
    %v774 = vpop.permute.xlu0 %773
    %775 = vrot.lane.b32.xlu0 %v661, 64
    %v776 = vpop.permute.xlu0 %775
    %779 = vrot.lane.b32.xlu0 %v657, 48
    %v780 = vpop.permute.xlu0 %779
    %781 = vrot.lane.b32.xlu0 %v661, 48
    %v782 = vpop.permute.xlu0 %781
    %785 = vrot.lane.b32.xlu0 %v657, 32
    %v786 = vpop.permute.xlu0 %785
    %787 = vrot.lane.b32.xlu0 %v661, 32
    %v788 = vpop.permute.xlu0 %787
    %791 = vrot.lane.b32.xlu0 %v657, 16
    %v792 = vpop.permute.xlu0 %791
    %793 = vrot.lane.b32.xlu0 %v661, 16
    %v794 = vpop.permute.xlu0 %793
    %799 = vrot.lane.b32.xlu0 %v659, 112
    %v800 = vpop.permute.xlu0 %799
    %801 = vrot.lane.b32.xlu0 %v663, 112
    %v802 = vpop.permute.xlu0 %801
    %805 = vrot.lane.b32.xlu0 %v659, 96
    %v806 = vpop.permute.xlu0 %805
    %807 = vrot.lane.b32.xlu0 %v663, 96
    %v808 = vpop.permute.xlu0 %807
    %811 = vrot.lane.b32.xlu0 %v659, 80
    %v812 = vpop.permute.xlu0 %811
    %813 = vrot.lane.b32.xlu0 %v663, 80
    %v814 = vpop.permute.xlu0 %813
    %817 = vrot.lane.b32.xlu0 %v659, 64
    %v818 = vpop.permute.xlu0 %817
    %819 = vrot.lane.b32.xlu0 %v663, 64
    %v820 = vpop.permute.xlu0 %819
    %823 = vrot.lane.b32.xlu0 %v659, 48
    %v824 = vpop.permute.xlu0 %823
    %825 = vrot.lane.b32.xlu0 %v663, 48
    %v826 = vpop.permute.xlu0 %825
    %v829 = vpack.c.bf16 %v618, %v614
    %v830 = vpack.c.bf16 %v670, %v668
    %v831 = vpack.c.bf16 %v676, %v674
    %v832 = vpack.c.bf16 %v682, %v680
    %v833 = vpack.c.bf16 %v688, %v686
    %v834 = vpack.c.bf16 %v694, %v692
    %v835 = vpack.c.bf16 %v700, %v698
    %v836 = vpack.c.bf16 %v706, %v704
    %v837 = vpack.c.bf16 %v620, %v616
    %v838 = vpack.c.bf16 %v714, %v712
    %v839 = vpack.c.bf16 %v720, %v718
    %v840 = vpack.c.bf16 %v726, %v724
    %v841 = vpack.c.bf16 %v732, %v730
    %v842 = vpack.c.bf16 %v738, %v736
    %v843 = vpack.c.bf16 %v744, %v742
    %v844 = vpack.c.bf16 %v750, %v748
    %v845 = vpack.c.bf16 %v661, %v657
    %v846 = vpack.c.bf16 %v758, %v756
    %v847 = vpack.c.bf16 %v764, %v762
    %v848 = vpack.c.bf16 %v770, %v768
    %v849 = vpack.c.bf16 %v776, %v774
    %v850 = vpack.c.bf16 %v782, %v780
    %v851 = vpack.c.bf16 %v788, %v786
    %v852 = vpack.c.bf16 %v794, %v792
    %v853 = vpack.c.bf16 %v663, %v659
    %v854 = vpack.c.bf16 %v802, %v800
    %v855 = vpack.c.bf16 %v808, %v806
    %v856 = vpack.c.bf16 %v814, %v812
    %v857 = vpack.c.bf16 %v820, %v818
    %v858 = vpack.c.bf16 %v826, %v824
    %v861 = vunpack.c.l.b16 %v86
    %v862 = vunpack.c.l.b16 %v87
    %v863 = vpack.c.b16 %v862, %v861
    %v866 = vsel %vm164, %v829, 0
    %v869 = vsel %vm164, %v830, 0
    %v872 = vsel %vm164, %v831, 0
    %v875 = vsel %vm164, %v832, 0
    %v878 = vsel %vm164, %v833, 0
    %v881 = vsel %vm164, %v834, 0
    %v884 = vsel %vm164, %v835, 0
    %v887 = vsel %vm164, %v836, 0
    %v890 = vsel %vm164, %v837, 0
    %v893 = vsel %vm164, %v838, 0
    %v896 = vsel %vm164, %v839, 0
    %v899 = vsel %vm164, %v840, 0
    %v902 = vsel %vm164, %v841, 0
    %v905 = vsel %vm164, %v842, 0
    %v908 = vsel %vm164, %v843, 0
    %v911 = vsel %vm164, %v844, 0
    %v914 = vsel %vm164, %v845, 0
    %v917 = vsel %vm164, %v846, 0
    %v920 = vsel %vm164, %v847, 0
    %v923 = vsel %vm164, %v848, 0
    %v926 = vsel %vm164, %v849, 0
    %v929 = vsel %vm164, %v850, 0
    %v932 = vsel %vm164, %v851, 0
    %v935 = vsel %vm164, %v852, 0
    %v938 = vsel %vm164, %v853, 0
    %v941 = vsel %vm164, %v854, 0
    %v944 = vsel %vm164, %v855, 0
    %v947 = vsel %vm164, %v856, 0
    %v950 = vsel %vm164, %v857, 0
    %v953 = vsel %vm164, %v858, 0
    %955 = vmatprep.subr.bf16.mxu0 0
    %956 = vmatpush1.bf16.msra.mxu0 %v863
    %957 = vmatprep.subr.bf16.mxu0 0
    %958 = vmatpush1.bf16.msra.mxu0 0
    %959 = vmatprep.subr.bf16.mxu0 0
    %960 = vmatpush1.bf16.msra.mxu0 0
    %961 = vmatprep.subr.bf16.mxu0 0
    %962 = vmatpush1.bf16.msra.mxu0 0
    %963 = vmatprep.subr.bf16.mxu0 0
    %964 = vmatpush1.bf16.msra.mxu0 0
    %965 = vmatprep.subr.bf16.mxu0 0
    %966 = vmatpush1.bf16.msra.mxu0 0
    %967 = vmatprep.subr.bf16.mxu0 0
    %968 = vmatpush1.bf16.msra.mxu0 0
    %969 = vmatprep.subr.bf16.mxu0 0
    %970 = vmatpush1.bf16.msra.mxu0 0
    %971 = vmatprep.subr.bf16.mxu0 0
    %972 = vmatpush1.bf16.msra.mxu0 0
    %973 = vmatprep.subr.bf16.mxu0 0
    %974 = vmatpush1.bf16.msra.mxu0 0
    %975 = vmatprep.subr.bf16.mxu0 0
    %976 = vmatpush1.bf16.msra.mxu0 0
    %977 = vmatprep.subr.bf16.mxu0 0
    %978 = vmatpush1.bf16.msra.mxu0 0
    %979 = vmatprep.subr.bf16.mxu0 0
    %980 = vmatpush1.bf16.msra.mxu0 0
    %981 = vmatprep.subr.bf16.mxu0 0
    %982 = vmatpush1.bf16.msra.mxu0 0
    %983 = vmatprep.subr.bf16.mxu0 0
    %984 = vmatpush1.bf16.msra.mxu0 0
    %985 = vmatprep.subr.bf16.mxu0 0
    %986 = vmatpush1.bf16.msra.mxu0 0
    %987 = vmatprep.mubr.bf16.mxu0 0
    %988 = vmatmul.mubr.bf16.gmra.mrb[0].mxu0 %v866
    %v989 = vpop.f32.mrb[0].mxu0
    %v990 = vadd.f32 0.0, %v989
    %v991 = vpop.f32.mrb[0].mxu0
    %v992 = vpop.f32.mrb[0].mxu0
    %v993 = vadd.f32 0.0, %v992
    %v994 = vpop.f32.mrb[0].mxu0
    %995 = vmatprep.mubr.bf16.mxu0 0
    %996 = vmatmul.mubr.bf16.gmra.mrb[0].mxu0 %v869
    %v997 = vpop.f32.mrb[0].mxu0
    %v998 = vadd.f32 0.0, %v997
    %v999 = vpop.f32.mrb[0].mxu0
    %v1000 = vpop.f32.mrb[0].mxu0
    %v1001 = vadd.f32 0.0, %v1000
    %v1002 = vpop.f32.mrb[0].mxu0
    %1003 = vmatprep.mubr.bf16.mxu0 0
    %1004 = vmatmul.mubr.bf16.gmra.mrb[0].mxu0 %v872
    %v1005 = vpop.f32.mrb[0].mxu0
    %v1006 = vadd.f32 0.0, %v1005
    %v1007 = vpop.f32.mrb[0].mxu0
    %v1008 = vpop.f32.mrb[0].mxu0
    %v1009 = vadd.f32 0.0, %v1008
    %v1010 = vpop.f32.mrb[0].mxu0
    %1011 = vmatprep.mubr.bf16.mxu0 0
    %1012 = vmatmul.mubr.bf16.gmra.mrb[0].mxu0 %v875
    %v1013 = vpop.f32.mrb[0].mxu0
    %v1014 = vadd.f32 0.0, %v1013
    %v1015 = vpop.f32.mrb[0].mxu0
    %v1016 = vpop.f32.mrb[0].mxu0
    %v1017 = vadd.f32 0.0, %v1016
    %v1018 = vpop.f32.mrb[0].mxu0
    %1019 = vmatprep.mubr.bf16.mxu0 0
    %1020 = vmatmul.mubr.bf16.gmra.mrb[0].mxu0 %v878
    %v1021 = vpop.f32.mrb[0].mxu0
    %v1022 = vadd.f32 0.0, %v1021
    %v1023 = vpop.f32.mrb[0].mxu0
    %v1024 = vpop.f32.mrb[0].mxu0
    %v1025 = vadd.f32 0.0, %v1024
    %v1026 = vpop.f32.mrb[0].mxu0
    %1027 = vmatprep.mubr.bf16.mxu0 0
    %1028 = vmatmul.mubr.bf16.gmra.mrb[0].mxu0 %v881
    %v1029 = vpop.f32.mrb[0].mxu0
    %v1030 = vadd.f32 0.0, %v1029
    %v1031 = vpop.f32.mrb[0].mxu0
    %v1032 = vpop.f32.mrb[0].mxu0
    %v1033 = vadd.f32 0.0, %v1032
    %v1034 = vpop.f32.mrb[0].mxu0
    %1035 = vmatprep.mubr.bf16.mxu0 0
    %1036 = vmatmul.mubr.bf16.gmra.mrb[0].mxu0 %v884
    %v1037 = vpop.f32.mrb[0].mxu0
    %v1038 = vadd.f32 0.0, %v1037
    %v1039 = vpop.f32.mrb[0].mxu0
    %v1040 = vpop.f32.mrb[0].mxu0
    %v1041 = vadd.f32 0.0, %v1040
    %v1042 = vpop.f32.mrb[0].mxu0
    %1043 = vmatprep.mubr.bf16.mxu0 0
    %1044 = vmatmul.mubr.bf16.gmra.mrb[0].mxu0 %v887
    %v1045 = vpop.f32.mrb[0].mxu0
    %v1046 = vadd.f32 0.0, %v1045
    %v1047 = vpop.f32.mrb[0].mxu0
    %v1048 = vpop.f32.mrb[0].mxu0
    %v1049 = vadd.f32 0.0, %v1048
    %v1050 = vpop.f32.mrb[0].mxu0
    %1051 = vmatprep.mubr.bf16.mxu0 0
    %1052 = vmatmul.mubr.bf16.gmra.mrb[0].mxu0 %v890
    %v1053 = vpop.f32.mrb[0].mxu0
    %v1054 = vadd.f32 0.0, %v1053
    %v1055 = vpop.f32.mrb[0].mxu0
    %v1056 = vpop.f32.mrb[0].mxu0
    %v1057 = vadd.f32 0.0, %v1056
    %v1058 = vpop.f32.mrb[0].mxu0
    %1059 = vmatprep.mubr.bf16.mxu0 0
    %1060 = vmatmul.mubr.bf16.gmra.mrb[0].mxu0 %v893
    %v1061 = vpop.f32.mrb[0].mxu0
    %v1062 = vadd.f32 0.0, %v1061
    %v1063 = vpop.f32.mrb[0].mxu0
    %v1064 = vpop.f32.mrb[0].mxu0
    %v1065 = vadd.f32 0.0, %v1064
    %v1066 = vpop.f32.mrb[0].mxu0
    %1067 = vmatprep.mubr.bf16.mxu0 0
    %1068 = vmatmul.mubr.bf16.gmra.mrb[0].mxu0 %v896
    %v1069 = vpop.f32.mrb[0].mxu0
    %v1070 = vadd.f32 0.0, %v1069
    %v1071 = vpop.f32.mrb[0].mxu0
    %v1072 = vpop.f32.mrb[0].mxu0
    %v1073 = vadd.f32 0.0, %v1072
    %v1074 = vpop.f32.mrb[0].mxu0
    %1075 = vmatprep.mubr.bf16.mxu0 0
    %1076 = vmatmul.mubr.bf16.gmra.mrb[0].mxu0 %v899
    %v1077 = vpop.f32.mrb[0].mxu0
    %v1078 = vadd.f32 0.0, %v1077
    %v1079 = vpop.f32.mrb[0].mxu0
    %v1080 = vpop.f32.mrb[0].mxu0
    %v1081 = vadd.f32 0.0, %v1080
    %v1082 = vpop.f32.mrb[0].mxu0
    %1083 = vmatprep.mubr.bf16.mxu0 0
    %1084 = vmatmul.mubr.bf16.gmra.mrb[0].mxu0 %v902
    %v1085 = vpop.f32.mrb[0].mxu0
    %v1086 = vadd.f32 0.0, %v1085
    %v1087 = vpop.f32.mrb[0].mxu0
    %v1088 = vpop.f32.mrb[0].mxu0
    %v1089 = vadd.f32 0.0, %v1088
    %v1090 = vpop.f32.mrb[0].mxu0
    %1091 = vmatprep.mubr.bf16.mxu0 0
    %1092 = vmatmul.mubr.bf16.gmra.mrb[0].mxu0 %v905
    %v1093 = vpop.f32.mrb[0].mxu0
    %v1094 = vadd.f32 0.0, %v1093
    %v1095 = vpop.f32.mrb[0].mxu0
    %v1096 = vpop.f32.mrb[0].mxu0
    %v1097 = vadd.f32 0.0, %v1096
    %v1098 = vpop.f32.mrb[0].mxu0
    %1099 = vmatprep.mubr.bf16.mxu0 0
    %1100 = vmatmul.mubr.bf16.gmra.mrb[0].mxu0 %v908
    %v1101 = vpop.f32.mrb[0].mxu0
    %v1102 = vadd.f32 0.0, %v1101
    %v1103 = vpop.f32.mrb[0].mxu0
    %v1104 = vpop.f32.mrb[0].mxu0
    %v1105 = vadd.f32 0.0, %v1104
    %v1106 = vpop.f32.mrb[0].mxu0
    %1107 = vmatprep.mubr.bf16.mxu0 0
    %1108 = vmatmul.mubr.bf16.gmra.mrb[0].mxu0 %v911
    %v1109 = vpop.f32.mrb[0].mxu0
    %v1110 = vadd.f32 0.0, %v1109
    %v1111 = vpop.f32.mrb[0].mxu0
    %v1112 = vpop.f32.mrb[0].mxu0
    %v1113 = vadd.f32 0.0, %v1112
    %v1114 = vpop.f32.mrb[0].mxu0
    %1115 = vmatprep.mubr.bf16.mxu0 0
    %1116 = vmatmul.mubr.bf16.gmra.mrb[0].mxu0 %v914
    %v1117 = vpop.f32.mrb[0].mxu0
    %v1118 = vadd.f32 0.0, %v1117
    %v1119 = vpop.f32.mrb[0].mxu0
    %v1120 = vpop.f32.mrb[0].mxu0
    %v1121 = vadd.f32 0.0, %v1120
    %v1122 = vpop.f32.mrb[0].mxu0
    %1123 = vmatprep.mubr.bf16.mxu0 0
    %1124 = vmatmul.mubr.bf16.gmra.mrb[0].mxu0 %v917
    %v1125 = vpop.f32.mrb[0].mxu0
    %v1126 = vadd.f32 0.0, %v1125
    %v1127 = vpop.f32.mrb[0].mxu0
    %v1128 = vpop.f32.mrb[0].mxu0
    %v1129 = vadd.f32 0.0, %v1128
    %v1130 = vpop.f32.mrb[0].mxu0
    %1131 = vmatprep.mubr.bf16.mxu0 0
    %1132 = vmatmul.mubr.bf16.gmra.mrb[0].mxu0 %v920
    %v1133 = vpop.f32.mrb[0].mxu0
    %v1134 = vadd.f32 0.0, %v1133
    %v1135 = vpop.f32.mrb[0].mxu0
    %v1136 = vpop.f32.mrb[0].mxu0
    %v1137 = vadd.f32 0.0, %v1136
    %v1138 = vpop.f32.mrb[0].mxu0
    %1139 = vmatprep.mubr.bf16.mxu0 0
    %1140 = vmatmul.mubr.bf16.gmra.mrb[0].mxu0 %v923
    %v1141 = vpop.f32.mrb[0].mxu0
    %v1142 = vadd.f32 0.0, %v1141
    %v1143 = vpop.f32.mrb[0].mxu0
    %v1144 = vpop.f32.mrb[0].mxu0
    %v1145 = vadd.f32 0.0, %v1144
    %v1146 = vpop.f32.mrb[0].mxu0
    %1147 = vmatprep.mubr.bf16.mxu0 0
    %1148 = vmatmul.mubr.bf16.gmra.mrb[0].mxu0 %v926
    %v1149 = vpop.f32.mrb[0].mxu0
    %v1150 = vadd.f32 0.0, %v1149
    %v1151 = vpop.f32.mrb[0].mxu0
    %v1152 = vpop.f32.mrb[0].mxu0
    %v1153 = vadd.f32 0.0, %v1152
    %v1154 = vpop.f32.mrb[0].mxu0
    %1155 = vmatprep.mubr.bf16.mxu0 0
    %1156 = vmatmul.mubr.bf16.gmra.mrb[0].mxu0 %v929
    %v1157 = vpop.f32.mrb[0].mxu0
    %v1158 = vadd.f32 0.0, %v1157
    %v1159 = vpop.f32.mrb[0].mxu0
    %v1160 = vpop.f32.mrb[0].mxu0
    %v1161 = vadd.f32 0.0, %v1160
    %v1162 = vpop.f32.mrb[0].mxu0
    %1163 = vmatprep.mubr.bf16.mxu0 0
    %1164 = vmatmul.mubr.bf16.gmra.mrb[0].mxu0 %v932
    %v1165 = vpop.f32.mrb[0].mxu0
    %v1166 = vadd.f32 0.0, %v1165
    %v1167 = vpop.f32.mrb[0].mxu0
    %v1168 = vpop.f32.mrb[0].mxu0
    %v1169 = vadd.f32 0.0, %v1168
    %v1170 = vpop.f32.mrb[0].mxu0
    %1171 = vmatprep.mubr.bf16.mxu0 0
    %1172 = vmatmul.mubr.bf16.gmra.mrb[0].mxu0 %v935
    %v1173 = vpop.f32.mrb[0].mxu0
    %v1174 = vadd.f32 0.0, %v1173
    %v1175 = vpop.f32.mrb[0].mxu0
    %v1176 = vpop.f32.mrb[0].mxu0
    %v1177 = vadd.f32 0.0, %v1176
    %v1178 = vpop.f32.mrb[0].mxu0
    %1179 = vmatprep.mubr.bf16.mxu0 0
    %1180 = vmatmul.mubr.bf16.gmra.mrb[0].mxu0 %v938
    %v1181 = vpop.f32.mrb[0].mxu0
    %v1182 = vadd.f32 0.0, %v1181
    %v1183 = vpop.f32.mrb[0].mxu0
    %v1184 = vpop.f32.mrb[0].mxu0
    %v1185 = vadd.f32 0.0, %v1184
    %v1186 = vpop.f32.mrb[0].mxu0
    %1187 = vmatprep.mubr.bf16.mxu0 0
    %1188 = vmatmul.mubr.bf16.gmra.mrb[0].mxu0 %v941
    %v1189 = vpop.f32.mrb[0].mxu0
    %v1190 = vadd.f32 0.0, %v1189
    %v1191 = vpop.f32.mrb[0].mxu0
    %v1192 = vpop.f32.mrb[0].mxu0
    %v1193 = vadd.f32 0.0, %v1192
    %v1194 = vpop.f32.mrb[0].mxu0
    %1195 = vmatprep.mubr.bf16.mxu0 0
    %1196 = vmatmul.mubr.bf16.gmra.mrb[0].mxu0 %v944
    %v1197 = vpop.f32.mrb[0].mxu0
    %v1198 = vadd.f32 0.0, %v1197
    %v1199 = vpop.f32.mrb[0].mxu0
    %v1200 = vpop.f32.mrb[0].mxu0
    %v1201 = vadd.f32 0.0, %v1200
    %v1202 = vpop.f32.mrb[0].mxu0
    %1203 = vmatprep.mubr.bf16.mxu0 0
    %1204 = vmatmul.mubr.bf16.gmra.mrb[0].mxu0 %v947
    %v1205 = vpop.f32.mrb[0].mxu0
    %v1206 = vadd.f32 0.0, %v1205
    %v1207 = vpop.f32.mrb[0].mxu0
    %v1208 = vpop.f32.mrb[0].mxu0
    %v1209 = vadd.f32 0.0, %v1208
    %v1210 = vpop.f32.mrb[0].mxu0
    %1211 = vmatprep.mubr.bf16.mxu0 0
    %1212 = vmatmul.mubr.bf16.gmra.mrb[0].mxu0 %v950
    %v1213 = vpop.f32.mrb[0].mxu0
    %v1214 = vadd.f32 0.0, %v1213
    %v1215 = vpop.f32.mrb[0].mxu0
    %v1216 = vpop.f32.mrb[0].mxu0
    %v1217 = vadd.f32 0.0, %v1216
    %v1218 = vpop.f32.mrb[0].mxu0
    %1219 = vmatprep.mubr.bf16.mxu0 0
    %1220 = vmatmul.mubr.bf16.gmra.mrb[0].mxu0 %v953
    %v1221 = vpop.f32.mrb[0].mxu0
    %v1222 = vadd.f32 0.0, %v1221
    %v1223 = vpop.f32.mrb[0].mxu0
    %v1224 = vpop.f32.mrb[0].mxu0
    %v1225 = vadd.f32 0.0, %v1224
    %v1226 = vpop.f32.mrb[0].mxu0
    %1227 = vdwg.mxu0
    %v1228 = vlaneseq
    %v1229 = vshrl.u32 %v1228, 7
    %v1230 = vadd.s32 %v1229, 8
    %v1231 = vlaneseq
    %v1232 = vand.u32 %v1231, 127
    %vm1233 = vcmp.ge.s32.totalorder %v1229, 5
    %vm1234 = vcmp.ge.s32.totalorder %v1230, 5
    %vm1235 = vcmp.lt.s32.totalorder %v1229, 11
    %vm1236 = vcmp.lt.s32.totalorder %v1230, 11
    %vm1237 = vmand %vm1233, %vm1235
    %vm1238 = vmand %vm1234, %vm1236
    %vm1239 = vcmp.ge.s32.totalorder %v1232, 5
    %vm1240 = vmand %vm1237, %vm1239
    %vm1241 = vmand %vm1238, %vm1239
    %vm1242 = vcmp.lt.s32.totalorder %v1232, 11
    %vm1243 = vmand %vm1240, %vm1242
    %vm1244 = vmand %vm1241, %vm1242
    %v1245 = vsel %vm1243, 1, 0
    %v1246 = vsel %vm1244, 1, 0
    %v1247 = vcvt.s32.f32 %v1245
    %v1248 = vcvt.s32.f32 %v1246
    %v1249 = vmul.f32 %v990, %v990
    %v1250 = vmul.f32 %v993, %v993
    %v1251 = vsub.f32 %v1006, %v1249
    %v1252 = vsub.f32 %v1009, %v1250
    %v1253 = vmul.f32 %v998, %v998
    %v1254 = vmul.f32 %v1001, %v1001
    %v1255 = vsub.f32 %v1014, %v1253
    %v1256 = vsub.f32 %v1017, %v1254
    %v1257 = vmul.f32 %v990, %v998
    %v1258 = vmul.f32 %v993, %v1001
    %v1259 = vsub.f32 %v1022, %v1257
    %v1260 = vsub.f32 %v1025, %v1258
    %v1261 = vmul.f32 %v990, 2.0
    %v1262 = vmul.f32 %v993, 2.0
    %v1263 = vmul.f32 %v1261, %v998
    %v1264 = vmul.f32 %v1262, %v1001
    %v1265 = vadd.f32 %v1263, 0.0001
    %v1266 = vadd.f32 %v1264, 0.0001
    %v1267 = vmul.f32 %v1259, 2.0
    %v1268 = vmul.f32 %v1260, 2.0
    %v1269 = vadd.f32 %v1267, 0.0009
    %v1270 = vadd.f32 %v1268, 0.0009
    %v1271 = vmul.f32 %v1265, %v1269
    %v1272 = vmul.f32 %v1266, %v1270
    %v1273 = vadd.f32 %v1249, %v1253
    %v1274 = vadd.f32 %v1250, %v1254
    %v1275 = vadd.f32 %v1273, 0.0001
    %v1276 = vadd.f32 %v1274, 0.0001
    %v1277 = vadd.f32 %v1251, %v1255
    %v1278 = vadd.f32 %v1252, %v1256
    %v1279 = vadd.f32 %v1277, 0.0009
    %v1280 = vadd.f32 %v1278, 0.0009
    %v1281 = vmul.f32 %v1275, %v1279
    %v1282 = vmul.f32 %v1276, %v1280
    %v1283 = vrcp.pop %v1281
    %v1284 = vrcp.pop %v1282
    %v1285 = vmul.f32 %v1271, %v1283
    %v1286 = vmul.f32 %v1272, %v1284
    %v1287 = vmul.f32 %v1285, %v1247
    %v1288 = vmul.f32 %v1286, %v1248
    %v1289 = vsel %vm164, %v1287, 0.0
    %v1290 = vsel %vm164, %v1288, 0.0
    %v1291 = vadd.f32 %v1289, %v1290
    %1292 = vadd.xlane.f32.xlu0 %v1291
    %v1293 = vpop.xlane.xlu0 %1292
    %v1294 = vrot.slane %v1293, 4
    %v1295 = vadd.f32 %v1293, %v1294
    %v1296 = vrot.slane %v1295, 2
    %v1297 = vadd.f32 %v1295, %v1296
    %v1298 = vrot.slane %v1297, 1
    %v1299 = vadd.f32 %v1297, %v1298
    %s1300 = vtos %v1299
    %s1301 = sadd.f32 %s1300, 0.0
    %v1302 = vmul.f32 %v1030, %v1030
    %v1303 = vmul.f32 %v1033, %v1033
    %v1304 = vsub.f32 %v1046, %v1302
    %v1305 = vsub.f32 %v1049, %v1303
    %v1306 = vmul.f32 %v1038, %v1038
    %v1307 = vmul.f32 %v1041, %v1041
    %v1308 = vsub.f32 %v1054, %v1306
    %v1309 = vsub.f32 %v1057, %v1307
    %v1310 = vmul.f32 %v1030, %v1038
    %v1311 = vmul.f32 %v1033, %v1041
    %v1312 = vsub.f32 %v1062, %v1310
    %v1313 = vsub.f32 %v1065, %v1311
    %v1314 = vmul.f32 %v1030, 2.0
    %v1315 = vmul.f32 %v1033, 2.0
    %v1316 = vmul.f32 %v1314, %v1038
    %v1317 = vmul.f32 %v1315, %v1041
    %v1318 = vadd.f32 %v1316, 0.0001
    %v1319 = vadd.f32 %v1317, 0.0001
    %v1320 = vmul.f32 %v1312, 2.0
    %v1321 = vmul.f32 %v1313, 2.0
    %v1322 = vadd.f32 %v1320, 0.0009
    %v1323 = vadd.f32 %v1321, 0.0009
    %v1324 = vmul.f32 %v1318, %v1322
    %v1325 = vmul.f32 %v1319, %v1323
    %v1326 = vadd.f32 %v1302, %v1306
    %v1327 = vadd.f32 %v1303, %v1307
    %v1328 = vadd.f32 %v1326, 0.0001
    %v1329 = vadd.f32 %v1327, 0.0001
    %v1330 = vadd.f32 %v1304, %v1308
    %v1331 = vadd.f32 %v1305, %v1309
    %v1332 = vadd.f32 %v1330, 0.0009
    %v1333 = vadd.f32 %v1331, 0.0009
    %v1334 = vmul.f32 %v1328, %v1332
    %v1335 = vmul.f32 %v1329, %v1333
    %v1336 = vrcp.pop %v1334
    %v1337 = vrcp.pop %v1335
    %v1338 = vmul.f32 %v1324, %v1336
    %v1339 = vmul.f32 %v1325, %v1337
    %v1340 = vmul.f32 %v1338, %v1247
    %v1341 = vmul.f32 %v1339, %v1248
    %v1342 = vsel %vm164, %v1340, 0.0
    %v1343 = vsel %vm164, %v1341, 0.0
    %v1344 = vadd.f32 %v1342, %v1343
    %1345 = vadd.xlane.f32.xlu0 %v1344
    %v1346 = vpop.xlane.xlu0 %1345
    %v1347 = vrot.slane %v1346, 4
    %v1348 = vadd.f32 %v1346, %v1347
    %v1349 = vrot.slane %v1348, 2
    %v1350 = vadd.f32 %v1348, %v1349
    %v1351 = vrot.slane %v1350, 1
    %v1352 = vadd.f32 %v1350, %v1351
    %s1353 = vtos %v1352
    %s1354 = sadd.f32 %s1301, %s1353
    %v1355 = vmul.f32 %v1070, %v1070
    %v1356 = vmul.f32 %v1073, %v1073
    %v1357 = vsub.f32 %v1086, %v1355
    %v1358 = vsub.f32 %v1089, %v1356
    %v1359 = vmul.f32 %v1078, %v1078
    %v1360 = vmul.f32 %v1081, %v1081
    %v1361 = vsub.f32 %v1094, %v1359
    %v1362 = vsub.f32 %v1097, %v1360
    %v1363 = vmul.f32 %v1070, %v1078
    %v1364 = vmul.f32 %v1073, %v1081
    %v1365 = vsub.f32 %v1102, %v1363
    %v1366 = vsub.f32 %v1105, %v1364
    %v1367 = vmul.f32 %v1070, 2.0
    %v1368 = vmul.f32 %v1073, 2.0
    %v1369 = vmul.f32 %v1367, %v1078
    %v1370 = vmul.f32 %v1368, %v1081
    %v1371 = vadd.f32 %v1369, 0.0001
    %v1372 = vadd.f32 %v1370, 0.0001
    %v1373 = vmul.f32 %v1365, 2.0
    %v1374 = vmul.f32 %v1366, 2.0
    %v1375 = vadd.f32 %v1373, 0.0009
    %v1376 = vadd.f32 %v1374, 0.0009
    %v1377 = vmul.f32 %v1371, %v1375
    %v1378 = vmul.f32 %v1372, %v1376
    %v1379 = vadd.f32 %v1355, %v1359
    %v1380 = vadd.f32 %v1356, %v1360
    %v1381 = vadd.f32 %v1379, 0.0001
    %v1382 = vadd.f32 %v1380, 0.0001
    %v1383 = vadd.f32 %v1357, %v1361
    %v1384 = vadd.f32 %v1358, %v1362
    %v1385 = vadd.f32 %v1383, 0.0009
    %v1386 = vadd.f32 %v1384, 0.0009
    %v1387 = vmul.f32 %v1381, %v1385
    %v1388 = vmul.f32 %v1382, %v1386
    %v1389 = vrcp.pop %v1387
    %v1390 = vrcp.pop %v1388
    %v1391 = vmul.f32 %v1377, %v1389
    %v1392 = vmul.f32 %v1378, %v1390
    %v1393 = vmul.f32 %v1391, %v1247
    %v1394 = vmul.f32 %v1392, %v1248
    %v1395 = vsel %vm164, %v1393, 0.0
    %v1396 = vsel %vm164, %v1394, 0.0
    %v1397 = vadd.f32 %v1395, %v1396
    %1398 = vadd.xlane.f32.xlu0 %v1397
    %v1399 = vpop.xlane.xlu0 %1398
    %v1400 = vrot.slane %v1399, 4
    %v1401 = vadd.f32 %v1399, %v1400
    %v1402 = vrot.slane %v1401, 2
    %v1403 = vadd.f32 %v1401, %v1402
    %v1404 = vrot.slane %v1403, 1
    %v1405 = vadd.f32 %v1403, %v1404
    %s1406 = vtos %v1405
    %s1407 = sadd.f32 %s1354, %s1406
    %v1408 = vmul.f32 %v1110, %v1110
    %v1409 = vmul.f32 %v1113, %v1113
    %v1410 = vsub.f32 %v1126, %v1408
    %v1411 = vsub.f32 %v1129, %v1409
    %v1412 = vmul.f32 %v1118, %v1118
    %v1413 = vmul.f32 %v1121, %v1121
    %v1414 = vsub.f32 %v1134, %v1412
    %v1415 = vsub.f32 %v1137, %v1413
    %v1416 = vmul.f32 %v1110, %v1118
    %v1417 = vmul.f32 %v1113, %v1121
    %v1418 = vsub.f32 %v1142, %v1416
    %v1419 = vsub.f32 %v1145, %v1417
    %v1420 = vmul.f32 %v1110, 2.0
    %v1421 = vmul.f32 %v1113, 2.0
    %v1422 = vmul.f32 %v1420, %v1118
    %v1423 = vmul.f32 %v1421, %v1121
    %v1424 = vadd.f32 %v1422, 0.0001
    %v1425 = vadd.f32 %v1423, 0.0001
    %v1426 = vmul.f32 %v1418, 2.0
    %v1427 = vmul.f32 %v1419, 2.0
    %v1428 = vadd.f32 %v1426, 0.0009
    %v1429 = vadd.f32 %v1427, 0.0009
    %v1430 = vmul.f32 %v1424, %v1428
    %v1431 = vmul.f32 %v1425, %v1429
    %v1432 = vadd.f32 %v1408, %v1412
    %v1433 = vadd.f32 %v1409, %v1413
    %v1434 = vadd.f32 %v1432, 0.0001
    %v1435 = vadd.f32 %v1433, 0.0001
    %v1436 = vadd.f32 %v1410, %v1414
    %v1437 = vadd.f32 %v1411, %v1415
    %v1438 = vadd.f32 %v1436, 0.0009
    %v1439 = vadd.f32 %v1437, 0.0009
    %v1440 = vmul.f32 %v1434, %v1438
    %v1441 = vmul.f32 %v1435, %v1439
    %v1442 = vrcp.pop %v1440
    %v1443 = vrcp.pop %v1441
    %v1444 = vmul.f32 %v1430, %v1442
    %v1445 = vmul.f32 %v1431, %v1443
    %v1446 = vmul.f32 %v1444, %v1247
    %v1447 = vmul.f32 %v1445, %v1248
    %v1448 = vsel %vm164, %v1446, 0.0
    %v1449 = vsel %vm164, %v1447, 0.0
    %v1450 = vadd.f32 %v1448, %v1449
    %1451 = vadd.xlane.f32.xlu0 %v1450
    %v1452 = vpop.xlane.xlu0 %1451
    %v1453 = vrot.slane %v1452, 4
    %v1454 = vadd.f32 %v1452, %v1453
    %v1455 = vrot.slane %v1454, 2
    %v1456 = vadd.f32 %v1454, %v1455
    %v1457 = vrot.slane %v1456, 1
    %v1458 = vadd.f32 %v1456, %v1457
    %s1459 = vtos %v1458
    %s1460 = sadd.f32 %s1407, %s1459
    %v1461 = vmul.f32 %v1150, %v1150
    %v1462 = vmul.f32 %v1153, %v1153
    %v1463 = vsub.f32 %v1166, %v1461
    %v1464 = vsub.f32 %v1169, %v1462
    %v1465 = vmul.f32 %v1158, %v1158
    %v1466 = vmul.f32 %v1161, %v1161
    %v1467 = vsub.f32 %v1174, %v1465
    %v1468 = vsub.f32 %v1177, %v1466
    %v1469 = vmul.f32 %v1150, %v1158
    %v1470 = vmul.f32 %v1153, %v1161
    %v1471 = vsub.f32 %v1182, %v1469
    %v1472 = vsub.f32 %v1185, %v1470
    %v1473 = vmul.f32 %v1150, 2.0
    %v1474 = vmul.f32 %v1153, 2.0
    %v1475 = vmul.f32 %v1473, %v1158
    %v1476 = vmul.f32 %v1474, %v1161
    %v1477 = vadd.f32 %v1475, 0.0001
    %v1478 = vadd.f32 %v1476, 0.0001
    %v1479 = vmul.f32 %v1471, 2.0
    %v1480 = vmul.f32 %v1472, 2.0
    %v1481 = vadd.f32 %v1479, 0.0009
    %v1482 = vadd.f32 %v1480, 0.0009
    %v1483 = vmul.f32 %v1477, %v1481
    %v1484 = vmul.f32 %v1478, %v1482
    %v1485 = vadd.f32 %v1461, %v1465
    %v1486 = vadd.f32 %v1462, %v1466
    %v1487 = vadd.f32 %v1485, 0.0001
    %v1488 = vadd.f32 %v1486, 0.0001
    %v1489 = vadd.f32 %v1463, %v1467
    %v1490 = vadd.f32 %v1464, %v1468
    %v1491 = vadd.f32 %v1489, 0.0009
    %v1492 = vadd.f32 %v1490, 0.0009
    %v1493 = vmul.f32 %v1487, %v1491
    %v1494 = vmul.f32 %v1488, %v1492
    %v1495 = vrcp.pop %v1493
    %v1496 = vrcp.pop %v1494
    %v1497 = vmul.f32 %v1483, %v1495
    %v1498 = vmul.f32 %v1484, %v1496
    %v1499 = vmul.f32 %v1497, %v1247
    %v1500 = vmul.f32 %v1498, %v1248
    %v1501 = vsel %vm164, %v1499, 0.0
    %v1502 = vsel %vm164, %v1500, 0.0
    %v1503 = vadd.f32 %v1501, %v1502
    %1504 = vadd.xlane.f32.xlu0 %v1503
    %v1505 = vpop.xlane.xlu0 %1504
    %v1506 = vrot.slane %v1505, 4
    %v1507 = vadd.f32 %v1505, %v1506
    %v1508 = vrot.slane %v1507, 2
    %v1509 = vadd.f32 %v1507, %v1508
    %v1510 = vrot.slane %v1509, 1
    %v1511 = vadd.f32 %v1509, %v1510
    %s1512 = vtos %v1511
    %s1513 = sadd.f32 %s1460, %s1512
    %v1514 = vmul.f32 %v1190, %v1190
    %v1515 = vmul.f32 %v1193, %v1193
    %v1516 = vsub.f32 %v1206, %v1514
    %v1517 = vsub.f32 %v1209, %v1515
    %v1518 = vmul.f32 %v1198, %v1198
    %v1519 = vmul.f32 %v1201, %v1201
    %v1520 = vsub.f32 %v1214, %v1518
    %v1521 = vsub.f32 %v1217, %v1519
    %v1522 = vmul.f32 %v1190, %v1198
    %v1523 = vmul.f32 %v1193, %v1201
    %v1524 = vsub.f32 %v1222, %v1522
    %v1525 = vsub.f32 %v1225, %v1523
    %v1526 = vmul.f32 %v1190, 2.0
    %v1527 = vmul.f32 %v1193, 2.0
    %v1528 = vmul.f32 %v1526, %v1198
    %v1529 = vmul.f32 %v1527, %v1201
    %v1530 = vadd.f32 %v1528, 0.0001
    %v1531 = vadd.f32 %v1529, 0.0001
    %v1532 = vmul.f32 %v1524, 2.0
    %v1533 = vmul.f32 %v1525, 2.0
    %v1534 = vadd.f32 %v1532, 0.0009
    %v1535 = vadd.f32 %v1533, 0.0009
    %v1536 = vmul.f32 %v1530, %v1534
    %v1537 = vmul.f32 %v1531, %v1535
    %v1538 = vadd.f32 %v1514, %v1518
    %v1539 = vadd.f32 %v1515, %v1519
    %v1540 = vadd.f32 %v1538, 0.0001
    %v1541 = vadd.f32 %v1539, 0.0001
    %v1542 = vadd.f32 %v1516, %v1520
    %v1543 = vadd.f32 %v1517, %v1521
    %v1544 = vadd.f32 %v1542, 0.0009
    %v1545 = vadd.f32 %v1543, 0.0009
    %v1546 = vmul.f32 %v1540, %v1544
    %v1547 = vmul.f32 %v1541, %v1545
    %v1548 = vrcp.pop %v1546
    %v1549 = vrcp.pop %v1547
    %v1550 = vmul.f32 %v1536, %v1548
    %v1551 = vmul.f32 %v1537, %v1549
    %v1552 = vmul.f32 %v1550, %v1247
    %v1553 = vmul.f32 %v1551, %v1248
    %v1554 = vsel %vm164, %v1552, 0.0
    %v1555 = vsel %vm164, %v1553, 0.0
    %v1556 = vadd.f32 %v1554, %v1555
    %1557 = vadd.xlane.f32.xlu0 %v1556
    %v1558 = vpop.xlane.xlu0 %1557
    %v1559 = vrot.slane %v1558, 4
    %v1560 = vadd.f32 %v1558, %v1559
    %v1561 = vrot.slane %v1560, 2
    %v1562 = vadd.f32 %v1560, %v1561
    %v1563 = vrot.slane %v1562, 1
    %v1564 = vadd.f32 %v1562, %v1563
    %s1565 = vtos %v1564
    %s1566 = sadd.f32 %s1513, %s1565
    %vm1567 = vcmp.eq.s32.totalorder %v1232, 0
    %v1568 = vstv %s180
    %v1569 = vsel %vm1567, %v1568, 0.0
    %vm1570 = vcmp.eq.s32.totalorder %v1232, 1
    %v1571 = vstv %s200
    %v1572 = vsel %vm1570, %v1571, 0.0
    %v1573 = vadd.f32 %v1569, %v1572
    %vm1574 = vcmp.eq.s32.totalorder %v1232, 2
    %v1575 = vstv %s220
    %v1576 = vsel %vm1574, %v1575, 0.0
    %v1577 = vadd.f32 %v1573, %v1576
    %vm1578 = vcmp.eq.s32.totalorder %v1232, 3
    %v1579 = vstv %s264
    %v1580 = vsel %vm1578, %v1579, 0.0
    %v1581 = vadd.f32 %v1577, %v1580
    %vm1582 = vcmp.eq.s32.totalorder %v1232, 4
    %v1583 = vstv %s1566
    %v1584 = vsel %vm1582, %v1583, 0.0
    %v1585 = vadd.f32 %v1581, %v1584
    %1586 = vst [vmem:[#allocation8] sm:$0xff] %v1585
    // Predicated region
    $region30: #{tpu_custom_call.1} parent=1 // pred_check
      _
    $region31: #{tpu_custom_call.1} parent=1 // pred_check_branch
      %1588 = sbr.rel (0) target = $region33
    $region32: #{tpu_custom_call.1} parent=1 // pred_region
      %s1590 = ssub.s32 128, 128
      %1591 = vsyncadd [#allocation4], %s1590
      %s1593 = sshll.u32 [#allocation8], 4
      %s1594 = int_to_ptr.vmem [resolvable:$true] %s1593
      %1596 = dma.vmem_to_hbm [thread:$0]  %s1594, 128, %s4, [#allocation4]
    $region33: #{tpu_custom_call.1} parent=1 // pred_fallthru
      _
    // Predicated region
    $region34: #{tpu_custom_call.1} parent=1 // pred_check
      _
    $region35: #{tpu_custom_call.1} parent=1 // pred_check_branch
      %1598 = sbr.rel (0) target = $region37
    $region36: #{tpu_custom_call.1} parent=1 // pred_region
      %1599 = dma.done [#allocation4], 128
    $region37: #{tpu_custom_call.1} parent=1 // pred_fallthru
      _
    %1600 = vsyncpa [#allocation3], 1
    %1601 = vsyncpa [#allocation6], 1
    %1602 = vsyncpa [#allocation4], 1

</llo_original>
